<compile_context>
chip_gen: v5e
topology: v5e:2x2
jax: 0.10.0
libtpu: 0.0.40
codegen_flags: <defaults>
</compile_context>

<pallas_src>
import functools

import numpy as np

import jax
import jax.numpy as jnp
from jax import lax
from jax.experimental import pallas as pl
from jax.experimental.pallas import tpu as pltpu


def upconv_kernel(x_ref, w_ref, shift_ref, o_ref):
    """Fused (upsample x2 -> conv3x3 -> BN -> ReLU) for one (batch, row-tile).

    x_ref:     (1, H0+2, W0, 3*Cin)   column-tap pre-expanded, zero-padded,
                                      ORIGINAL-resolution input (bf16);
                                      last dim = (col tap kappa, cin).
    w_ref:     (2, 6*Cin, 2*Cout)     parity-folded conv weights with the BN
                                      scale folded in (bf16);
                                      K = (row tap s, kappa, cin),
                                      N = (col parity b, cout).
    shift_ref: (1, 2*Cout)            BN shift + folded conv bias (f32).
    o_ref:     (1, TI, 2, W0, 2*Cout) output tile (bf16); dim2 = row parity a,
                                      last dim = (col parity b, cout) so NHWC
                                      is a pure reshape on the host side.
    """
    w0 = x_ref.shape[2]
    cin3 = x_ref.shape[3]              # 3 * Cin
    ti = o_ref.shape[1]                # input rows per tile

    t = pl.program_id(1)
    base = pl.multiple_of(t * ti, ti)  # first input row of this tile

    # Shared im2col: 3 aligned, full-width row-offset slices (r = 0, 1, 2) of
    # the already column-expanded image, one lane concat -> (ti*W0, 9*Cin).
    # Row parity a consumes the contiguous K-window of row offsets {a, a+1}.
    patch = jnp.concatenate(
        [x_ref[0, pl.ds(base + r, ti), :, :] for r in (0, 1, 2)],
        axis=-1,
    ).reshape(ti * w0, 3 * cin3)

    shift = shift_ref[...]             # (1, 2*Cout) f32, loaded once per tile

    for a in (0, 1):                   # output row parity (static unroll)
        z = jnp.dot(patch[:, a * cin3:(a + 2) * cin3], w_ref[a],
                    preferred_element_type=jnp.float32)
        y = jnp.maximum(z + shift, 0.0)           # BN shift + ReLU epilogue
        o_ref[0, :, a, :, :] = y.reshape(ti, w0, -1).astype(o_ref.dtype)


def _pick_tile_rows(h0, w0, *, min_t_steps=4, max_m=512):
    """Row-tile ti that divides h0, keeps dot M = ti*w0 sublane-friendly and
    bounded, and gives the sequential grid axis >= min_t_steps steps so the
    pipeline warm-up is amortized (important for tiny demo-sized grids)."""
    divisors = [d for d in range(1, h0 + 1) if h0 % d == 0]
    cands = [d for d in divisors if (d * w0) % 8 == 0] or divisors
    good = [d for d in cands if h0 // d >= min_t_steps and d * w0 <= max_m]
    if good:
        return max(good)
    small = [d for d in cands if d * w0 <= max_m]
    return max(small) if small else min(cands)


@functools.partial(jax.jit, static_argnames=("eps", "compute_dtype"))
def up_conv_forward(x_nchw, w_hwio, conv_bias, gamma, beta,
                    running_mean, running_var, eps=1e-5,
                    compute_dtype=jnp.bfloat16):
    n, cin, h0, w0 = x_nchw.shape
    cout = w_hwio.shape[-1]
    ti = _pick_tile_rows(h0, w0)

    # ---- fold BN (inference) + conv bias: the per-channel scale goes INTO the
    # packed weights; only the shift stays as a (1, 2*Cout) f32 epilogue operand.
    scale = gamma / jnp.sqrt(running_var + eps)                    # (cout,)
    shift = beta + (conv_bias - running_mean) * scale              # (cout,)
    shift2 = jnp.tile(shift.reshape(1, cout), (1, 2)).astype(jnp.float32)

    # ---- fold upsample(x2) o conv3x3 into parity-grouped stencils ------------
    # Output pixel (2i+a, 2j+b) reads xp[i + (a+dy+1)//2, j + (b+dx+1)//2].
    # R[a, s, dy]     = 1 iff (a+dy+1)//2 == a + s   (row tap s in {0,1})
    # C[b, kappa, dx] = 1 iff (b+dx+1)//2 == kappa   (col tap kappa in {0,1,2})
    R = np.zeros((2, 2, 3), np.float32)
    C = np.zeros((2, 3, 3), np.float32)
    for a in range(2):
        for dy in range(3):
            R[a, (a + dy + 1) // 2 - a, dy] = 1.0
    for b in range(2):
        for dx in range(3):
            C[b, (b + dx + 1) // 2, dx] = 1.0
    # (a, s, kappa, cin, b, cout) -> (2, 6*cin, 2*cout); column parity lives in
    # the matmul N dimension so the kernel's output stores stay lane-dense.
    w_scaled = w_hwio.astype(jnp.float32) * scale          # BN scale folded in
    w_pack = jnp.einsum("asy,bkx,yxio->askibo", R, C, w_scaled)
    w_pack = w_pack.reshape(2, 6 * cin, 2 * cout).astype(compute_dtype)

    # ---- glue (one fused XLA pass over the SMALL original-res input):
    # NCHW -> NHWC, zero-pad by 1, and pre-expand the 3 column taps so the
    # kernel only ever does aligned full-width row slices (no misaligned
    # W0+2 column slices in the hot loop).  Shape: (n, h0+2, w0, 3*cin) bf16.
    x = jnp.transpose(x_nchw, (0, 2, 3, 1)).astype(compute_dtype)
    xp = jnp.pad(x, ((0, 0), (1, 1), (1, 1), (0, 0)))
    xcol = jnp.concatenate([xp[:, :, k:k + w0, :] for k in (0, 1, 2)], axis=-1)

    # ---- Pallas hot path ------------------------------------------------------
    grid = (n, h0 // ti)
    out_k = pl.pallas_call(
        upconv_kernel,
        out_shape=jax.ShapeDtypeStruct((n, h0, 2, w0, 2 * cout), compute_dtype),
        grid_spec=pltpu.PrefetchScalarGridSpec(
            num_scalar_prefetch=0,
            grid=grid,
            in_specs=[
                # Whole (small, original-res) expanded image per batch element;
                # overlapping haloed row tiles are sliced in-kernel with pl.ds
                # (halos are not expressible with BlockSpec).  The block index
                # depends only on the batch axis, so it is DMA'd once per batch
                # element (the t axis is sequential -> no re-fetch).
                pl.BlockSpec((1, h0 + 2, w0, 3 * cin),
                             lambda bb, t: (bb, 0, 0, 0)),
                pl.BlockSpec((2, 6 * cin, 2 * cout), lambda bb, t: (0, 0, 0)),
                pl.BlockSpec((1, 2 * cout), lambda bb, t: (0, 0)),
            ],
            out_specs=pl.BlockSpec((1, ti, 2, w0, 2 * cout),
                                   lambda bb, t: (bb, t, 0, 0, 0)),
        ),
        compiler_params=pltpu.CompilerParams(
            # Batch across cores; row-tile axis sequential (per-batch resident
            # input fetched once, and correct if a per-batch scratch init under
            # pl.when(t == 0) is ever added).
            dimension_semantics=("parallel", "arbitrary"),
            vmem_limit_bytes=32 * 1024 * 1024),
    )(xcol, w_pack, shift2)

    # (n, h0, 2, w0, 2*cout) == (n, (h0, a), (w0, b), cout): NHWC is a PURE
    # reshape -- no de-interleave transpose pass.  NHWC-native consumers can
    # stop here; NCHW (PyTorch semantics) needs one bf16 transpose.
    out_nhwc = out_k.reshape(n, 2 * h0, 2 * w0, cout)
    return jnp.transpose(out_nhwc, (0, 3, 1, 2))


def reference_forward(x_nchw, w_hwio, conv_bias, gamma, beta,
                      running_mean, running_var, eps=1e-5):
    # Pure-JAX reference matching PyTorch semantics (eval-mode BN), f32.
    xu = jnp.repeat(jnp.repeat(x_nchw, 2, axis=2), 2, axis=3)
    w_oihw = jnp.transpose(w_hwio, (3, 2, 0, 1))
    y = lax.conv_general_dilated(
        xu, w_oihw, window_strides=(1, 1), padding=((1, 1), (1, 1)),
        dimension_numbers=("NCHW", "OIHW", "NCHW"),
        precision=lax.Precision.HIGHEST)
    y = y + conv_bias.reshape(1, -1, 1, 1)
    m = running_mean.reshape(1, -1, 1, 1)
    v = running_var.reshape(1, -1, 1, 1)
    g = gamma.reshape(1, -1, 1, 1)
    b = beta.reshape(1, -1, 1, 1)
    y = g * (y - m) / jnp.sqrt(v + eps) + b
    return jnp.maximum(y, 0.0)


if __name__ == "__main__":
    key = jax.random.PRNGKey(0)
    k_x, k_w, k_b, k_g, k_be, k_m, k_v = jax.random.split(key, 7)

    # Small but representative U-Net up_conv shapes; channels chosen so the
    # matmul / store tiles are MXU- and lane-aligned (per-parity K = 6*Cin =
    # 768, dot N = 2*Cout = 128, output last dim = 128 lanes).
    N, CH_IN, CH_OUT, H0, W0 = 2, 128, 64, 16, 16

    x = jax.random.normal(k_x, (N, CH_IN, H0, W0), jnp.float32)
    w_hwio = jax.random.normal(k_w, (3, 3, CH_IN, CH_OUT), jnp.float32) * 0.05
    conv_bias = 0.1 * jax.random.normal(k_b, (CH_OUT,), jnp.float32)
    gamma = 1.0 + 0.1 * jax.random.normal(k_g, (CH_OUT,), jnp.float32)
    beta = 0.1 * jax.random.normal(k_be, (CH_OUT,), jnp.float32)
    running_mean = 0.1 * jax.random.normal(k_m, (CH_OUT,), jnp.float32)
    running_var = jax.random.uniform(k_v, (CH_OUT,), jnp.float32, 0.5, 1.5)

    out = up_conv_forward(x, w_hwio, conv_bias, gamma, beta,
                          running_mean, running_var)
    out = jax.block_until_ready(out)

    ref = reference_forward(x, w_hwio, conv_bias, gamma, beta,
                            running_mean, running_var)
    ref = jax.block_until_ready(ref)

    assert out.shape == (N, CH_OUT, 2 * H0, 2 * W0), out.shape
    # bf16 inputs / bf16 (BN-scaled) weights / bf16 output with f32 MXU
    # accumulation vs a full-f32 reference: tolerance sized for ~9*Cin
    # bf16-rounded products plus one bf16 output rounding.
    out_f32 = out.astype(jnp.float32)
    max_err = float(jnp.max(jnp.abs(out_f32 - ref)))
    assert jnp.allclose(out_f32, ref, atol=1e-1, rtol=5e-2), max_err

    print("KERNEL_OK")
</pallas_src>

<mosaic_0001>
module attributes {stable_mosaic.version = 11 : i64} {
  func.func @upconv_kernel(%arg0: i32, %arg1: i32, %arg2: memref<1x18x16x384xbf16, #tpu.memory_space<vmem>>, %arg3: memref<2x768x128xbf16, #tpu.memory_space<vmem>>, %arg4: memref<1x128xf32, #tpu.memory_space<vmem>>, %arg5: memref<1x4x2x16x128xbf16, #tpu.memory_space<vmem>>) attributes {dimension_semantics = [#tpu.dimension_semantics<parallel>, #tpu.dimension_semantics<arbitrary>], iteration_bounds = array<i64: 2, 4>, scalar_prefetch = 0 : i64, scratch_operands = 0 : i64, tpu.core_type = #tpu.core_type<tc>, window_params = [{transform_indices = @transform_0, window_bounds = array<i64: 1, 18, 16, 384>}, {pipeline_mode = #tpu.pipeline_mode<synchronous>, transform_indices = @transform_1, window_bounds = array<i64: 2, 768, 128>}, {pipeline_mode = #tpu.pipeline_mode<synchronous>, transform_indices = @transform_2, window_bounds = array<i64: 1, 128>}, {transform_indices = @transform_3, window_bounds = array<i64: 1, 4, 2, 16, 128>}]} {
    %c4_i32 = arith.constant 4 : i32
    %0 = arith.muli %arg1, %c4_i32 : i32
    %1 = tpu.assume_multiple %0, 4 : i32
    %c0_i32 = arith.constant 0 : i32
    %2 = arith.addi %1, %c0_i32 : i32
    %c0 = arith.constant 0 : index
    %3 = arith.index_cast %2 : i32 to index
    %c0_0 = arith.constant 0 : index
    %c0_1 = arith.constant 0 : index
    %4 = vector.load %arg2[%c0, %3, %c0_0, %c0_1] : memref<1x18x16x384xbf16, #tpu.memory_space<vmem>>, vector<1x4x16x384xbf16>
    %5 = vector.shape_cast %4 : vector<1x4x16x384xbf16> to vector<4x16x384xbf16>
    %c1_i32 = arith.constant 1 : i32
    %6 = arith.addi %1, %c1_i32 : i32
    %c0_2 = arith.constant 0 : index
    %7 = arith.index_cast %6 : i32 to index
    %c0_3 = arith.constant 0 : index
    %c0_4 = arith.constant 0 : index
    %8 = vector.load %arg2[%c0_2, %7, %c0_3, %c0_4] : memref<1x18x16x384xbf16, #tpu.memory_space<vmem>>, vector<1x4x16x384xbf16>
    %9 = vector.shape_cast %8 : vector<1x4x16x384xbf16> to vector<4x16x384xbf16>
    %c2_i32 = arith.constant 2 : i32
    %10 = arith.addi %1, %c2_i32 : i32
    %c0_5 = arith.constant 0 : index
    %11 = arith.index_cast %10 : i32 to index
    %c0_6 = arith.constant 0 : index
    %c0_7 = arith.constant 0 : index
    %12 = vector.load %arg2[%c0_5, %11, %c0_6, %c0_7] : memref<1x18x16x384xbf16, #tpu.memory_space<vmem>>, vector<1x4x16x384xbf16>
    %13 = vector.shape_cast %12 : vector<1x4x16x384xbf16> to vector<4x16x384xbf16>
    %14 = tpu.concatenate %5, %9, %13 in 2 : vector<4x16x384xbf16>, vector<4x16x384xbf16>, vector<4x16x384xbf16> -> vector<4x16x1152xbf16>
    %15 = vector.shape_cast %14 : vector<4x16x1152xbf16> to vector<64x1152xbf16>
    %c0_8 = arith.constant 0 : index
    %c0_9 = arith.constant 0 : index
    %16 = vector.load %arg4[%c0_8, %c0_9] : memref<1x128xf32, #tpu.memory_space<vmem>>, vector<1x128xf32>
    %17 = vector.extract_strided_slice %15 {offsets = [0, 0], sizes = [64, 768], strides = [1, 1]} : vector<64x1152xbf16> to vector<64x768xbf16>
    %c0_10 = arith.constant 0 : index
    %c0_11 = arith.constant 0 : index
    %c0_12 = arith.constant 0 : index
    %18 = vector.load %arg3[%c0_10, %c0_11, %c0_12] : memref<2x768x128xbf16, #tpu.memory_space<vmem>>, vector<1x768x128xbf16>
    %19 = vector.shape_cast %18 : vector<1x768x128xbf16> to vector<768x128xbf16>
    %cst = arith.constant dense<0.000000e+00> : vector<64x128xf32>
    %20 = tpu.matmul %17, %19, %cst {dimension_numbers = #tpu.dot_dimension_numbers<[1], [0], [0], [1], [0, 0, 1, 1], [], []>} : vector<64x768xbf16>, vector<768x128xbf16>, vector<64x128xf32> -> vector<64x128xf32>
    %21 = vector.broadcast %16 : vector<1x128xf32> to vector<64x128xf32>
    %22 = arith.addf %20, %21 : vector<64x128xf32>
    %cst_13 = arith.constant 0.000000e+00 : f32
    %23 = vector.broadcast %cst_13 : f32 to vector<64x128xf32>
    %24 = arith.maximumf %22, %23 : vector<64x128xf32>
    %25 = vector.shape_cast %24 : vector<64x128xf32> to vector<4x16x128xf32>
    %26 = arith.truncf %25 : vector<4x16x128xf32> to vector<4x16x128xbf16>
    %c0_14 = arith.constant 0 : index
    %c0_15 = arith.constant 0 : index
    %c0_16 = arith.constant 0 : index
    %c0_17 = arith.constant 0 : index
    %c0_18 = arith.constant 0 : index
    %27 = vector.load %arg5[%c0_14, %c0_15, %c0_16, %c0_17, %c0_18] : memref<1x4x2x16x128xbf16, #tpu.memory_space<vmem>>, vector<1x4x1x16x128xbf16>
    %28 = vector.shape_cast %27 : vector<1x4x1x16x128xbf16> to vector<4x16x128xbf16>
    %29 = vector.shape_cast %26 : vector<4x16x128xbf16> to vector<1x4x1x16x128xbf16>
    tpu.vector_store %arg5[%c0_14, %c0_15, %c0_16, %c0_17, %c0_18], %29 {strides = array<i32>} : memref<1x4x2x16x128xbf16, #tpu.memory_space<vmem>>, vector<1x4x1x16x128xbf16>,
    %30 = vector.extract_strided_slice %15 {offsets = [0, 384], sizes = [64, 768], strides = [1, 1]} : vector<64x1152xbf16> to vector<64x768xbf16>
    %c1 = arith.constant 1 : index
    %c0_19 = arith.constant 0 : index
    %c0_20 = arith.constant 0 : index
    %31 = vector.load %arg3[%c1, %c0_19, %c0_20] : memref<2x768x128xbf16, #tpu.memory_space<vmem>>, vector<1x768x128xbf16>
    %32 = vector.shape_cast %31 : vector<1x768x128xbf16> to vector<768x128xbf16>
    %cst_21 = arith.constant dense<0.000000e+00> : vector<64x128xf32>
    %33 = tpu.matmul %30, %32, %cst_21 {dimension_numbers = #tpu.dot_dimension_numbers<[1], [0], [0], [1], [0, 0, 1, 1], [], []>} : vector<64x768xbf16>, vector<768x128xbf16>, vector<64x128xf32> -> vector<64x128xf32>
    %34 = vector.broadcast %16 : vector<1x128xf32> to vector<64x128xf32>
    %35 = arith.addf %33, %34 : vector<64x128xf32>
    %cst_22 = arith.constant 0.000000e+00 : f32
    %36 = vector.broadcast %cst_22 : f32 to vector<64x128xf32>
    %37 = arith.maximumf %35, %36 : vector<64x128xf32>
    %38 = vector.shape_cast %37 : vector<64x128xf32> to vector<4x16x128xf32>
    %39 = arith.truncf %38 : vector<4x16x128xf32> to vector<4x16x128xbf16>
    %c0_23 = arith.constant 0 : index
    %c0_24 = arith.constant 0 : index
    %c1_25 = arith.constant 1 : index
    %c0_26 = arith.constant 0 : index
    %c0_27 = arith.constant 0 : index
    %40 = vector.load %arg5[%c0_23, %c0_24, %c1_25, %c0_26, %c0_27] : memref<1x4x2x16x128xbf16, #tpu.memory_space<vmem>>, vector<1x4x1x16x128xbf16>
    %41 = vector.shape_cast %40 : vector<1x4x1x16x128xbf16> to vector<4x16x128xbf16>
    %42 = vector.shape_cast %39 : vector<4x16x128xbf16> to vector<1x4x1x16x128xbf16>
    tpu.vector_store %arg5[%c0_23, %c0_24, %c1_25, %c0_26, %c0_27], %42 {strides = array<i32>} : memref<1x4x2x16x128xbf16, #tpu.memory_space<vmem>>, vector<1x4x1x16x128xbf16>,
    return
  }
  func.func @transform_0(%arg0: i32, %arg1: i32) -> (i32, i32, i32, i32) {
    %c0_i32 = arith.constant 0 : i32
    %c0_i32_0 = arith.constant 0 : i32
    %c0_i32_1 = arith.constant 0 : i32
    %c0_i32_2 = arith.constant 0 : i32
    return %arg0, %c0_i32, %c0_i32_0, %c0_i32_1 : i32, i32, i32, i32
  }
  func.func @transform_1(%arg0: i32, %arg1: i32) -> (i32, i32, i32) {
    %c0_i32 = arith.constant 0 : i32
    %c0_i32_0 = arith.constant 0 : i32
    %c0_i32_1 = arith.constant 0 : i32
    %c0_i32_2 = arith.constant 0 : i32
    return %c0_i32, %c0_i32_0, %c0_i32_1 : i32, i32, i32
  }
  func.func @transform_2(%arg0: i32, %arg1: i32) -> (i32, i32) {
    %c0_i32 = arith.constant 0 : i32
    %c0_i32_0 = arith.constant 0 : i32
    %c0_i32_1 = arith.constant 0 : i32
    return %c0_i32, %c0_i32_0 : i32, i32
  }
  func.func @transform_3(%arg0: i32, %arg1: i32) -> (i32, i32, i32, i32, i32) {
    %c0_i32 = arith.constant 0 : i32
    %c0_i32_0 = arith.constant 0 : i32
    %c0_i32_1 = arith.constant 0 : i32
    %c0_i32_2 = arith.constant 0 : i32
    return %arg0, %arg1, %c0_i32, %c0_i32_0, %c0_i32_1 : i32, i32, i32, i32, i32
  }
}

</mosaic_0001>

<llo_original>
// kernel: up_conv_forward.1
$region0: #{up_conv_forward.1}
  #allocation0 [shape = 'u32[]', space=smem, size = 0x4, offset = 0x4, fixed_abs, tag = 'smem constant byte address 0x4 - core index']
  #allocation1 [shape = 'u32[72,128]{1,0:T(1,128)}', space=vmem, size = 0x9000, scoped, tag = 'internal scratch']
  %s0 = inlined_call_operand.vmem [shape: bf16[2,18,16,384], index: 0, kind: input, shape index: {}]
  %s1 = inlined_call_operand.vmem [shape: bf16[2,768,128], index: 1, kind: input, shape index: {}]
  %s2 = inlined_call_operand.vmem [shape: f32[1,128], index: 2, kind: input, shape index: {}]
  %s3 = inlined_call_operand.vmem [shape: bf16[2,16,2,16,128], index: 3, kind: output, shape index: {}]
  %s4 = sld [smem:[#allocation0]]
  $region45: #{up_conv_forward.1} parent=0
    _
  %s6 = ssub.s32 1, %s4
  %s7 = scalar_select 0, %s6, %s4
  loop: start=0, step=1, limit=10
  $region2: #{up_conv_forward.1} parent=0 // loop_pre_header
    _
  $region3: #{up_conv_forward.1} parent=0 // loop_header
    %s9 = sphi 0, %s13
    %p10 = scmp.ge.s32.totalorder %s9, 10
    %s16 = sphi 0, %s28
    %s17 = sphi 0, %s24
    %s18 = sphi 0, %s16
    %s19 = sphi 0, %s17
    %s20 = sphi 0, %s18
    %s21 = sphi 0, %s19
    %s31 = sphi 0, %s33
    %s34 = sphi 0, %s31
    %s35 = sphi 0, %s34
    %s51 = sphi 0, %s35
    %s55 = sphi 0, %s55
    %s57 = sphi 0, %s55
    %s58 = sphi 0, %s57
    %s72 = sphi 0, %s58
    %s76 = sphi 0, %s76
    %s78 = sphi 0, %s76
    %s79 = sphi 0, %s78
    %s93 = sphi 0, %s79
    %s101 = sphi 0, %s103
    %s104 = sphi 0, %s101
    %s105 = sphi 0, %s104
    %s121 = sphi 0, %s105
  $region4: #{up_conv_forward.1} parent=0 // loop_header_branch
    %12 = sbr.rel (%p10) target = $region8
  $region5: #{up_conv_forward.1} parent=0 // loop_body
    %s14 = ssub.s32 %s9, 1
    %s15 = ssub.s32 %s9, 2
    %s22 = sadd.s32 1, %s17
    %p23 = scmp.ge.s32.totalorder %s22, 4
    %s24 = scalar_select %p23, 0, %s22
    %s25 = sadd.s32 1, %s16
    %s26 = scalar_select %p23, %s25, %s16
    %p27 = scmp.ge.s32.totalorder %s26, 2
    %s28 = scalar_select %p27, 0, %s26
    %s29 = ssub.s32 %s16, %s28
    %p30 = scmp.eq.s32.totalorder %s29, 0
    %s32 = sadd.s32 %s31, 1
    %s33 = scalar_select %p30, %s31, %s32
    %p36 = pneg %p30
    %p37 = scmp.eq.s32.totalorder %s9, 7
    %p38 = por %p36, %p37
    %p39 = scmp.ne.s32.totalorder %s31, %s34
    %p40 = scmp.eq.s32.totalorder %s9, 0
    %p41 = por %p39, %p40
    %p42 = scmp.ne.s32.totalorder %s31, %s34
    %p43 = scmp.eq.s32.totalorder %s14, 7
    %p44 = por %p42, %p43
    %p45 = scmp.ne.s32.totalorder %s34, %s35
    %p46 = scmp.eq.s32.totalorder %s14, 0
    %p47 = por %p45, %p46
    %p48 = scmp.ne.s32.totalorder %s34, %s35
    %p49 = scmp.eq.s32.totalorder %s15, 7
    %p50 = por %p48, %p49
    %p52 = scmp.ne.s32.totalorder %s35, %s51
    %p53 = scmp.eq.s32.totalorder %s15, 0
    %p54 = por %p52, %p53
    %s56 = sadd.s32 %s55, 1
    %p59 = scmp.eq.s32.totalorder %s9, 7
    %p60 = scmp.ne.s32.totalorder %s55, %s57
    %p61 = scmp.eq.s32.totalorder %s9, 0
    %p62 = por %p60, %p61
    %p63 = scmp.ne.s32.totalorder %s55, %s57
    %p64 = scmp.eq.s32.totalorder %s14, 7
    %p65 = por %p63, %p64
    %p66 = scmp.ne.s32.totalorder %s57, %s58
    %p67 = scmp.eq.s32.totalorder %s14, 0
    %p68 = por %p66, %p67
    %p69 = scmp.ne.s32.totalorder %s57, %s58
    %p70 = scmp.eq.s32.totalorder %s15, 7
    %p71 = por %p69, %p70
    %p73 = scmp.ne.s32.totalorder %s58, %s72
    %p74 = scmp.eq.s32.totalorder %s15, 0
    %p75 = por %p73, %p74
    %s77 = sadd.s32 %s76, 1
    %p80 = scmp.eq.s32.totalorder %s9, 7
    %p81 = scmp.ne.s32.totalorder %s76, %s78
    %p82 = scmp.eq.s32.totalorder %s9, 0
    %p83 = por %p81, %p82
    %p84 = scmp.ne.s32.totalorder %s76, %s78
    %p85 = scmp.eq.s32.totalorder %s14, 7
    %p86 = por %p84, %p85
    %p87 = scmp.ne.s32.totalorder %s78, %s79
    %p88 = scmp.eq.s32.totalorder %s14, 0
    %p89 = por %p87, %p88
    %p90 = scmp.ne.s32.totalorder %s78, %s79
    %p91 = scmp.eq.s32.totalorder %s15, 7
    %p92 = por %p90, %p91
    %p94 = scmp.ne.s32.totalorder %s79, %s93
    %p95 = scmp.eq.s32.totalorder %s15, 0
    %p96 = por %p94, %p95
    %s97 = ssub.s32 %s16, %s28
    %s98 = ssub.s32 %s17, %s24
    %s99 = sor.u32 %s97, %s98
    %p100 = scmp.eq.s32.totalorder %s99, 0
    %s102 = sadd.s32 %s101, 1
    %s103 = scalar_select %p100, %s101, %s102
    %p106 = pneg %p100
    %p107 = scmp.eq.s32.totalorder %s9, 7
    %p108 = por %p106, %p107
    %p109 = scmp.ne.s32.totalorder %s101, %s104
    %p110 = scmp.eq.s32.totalorder %s9, 0
    %p111 = por %p109, %p110
    %p112 = scmp.ne.s32.totalorder %s101, %s104
    %p113 = scmp.eq.s32.totalorder %s14, 7
    %p114 = por %p112, %p113
    %p115 = scmp.ne.s32.totalorder %s104, %s105
    %p116 = scmp.eq.s32.totalorder %s14, 0
    %p117 = por %p115, %p116
    %p118 = scmp.ne.s32.totalorder %s104, %s105
    %p119 = scmp.eq.s32.totalorder %s15, 7
    %p120 = por %p118, %p119
    %p122 = scmp.ne.s32.totalorder %s105, %s121
    %p123 = scmp.eq.s32.totalorder %s15, 0
    %p124 = por %p122, %p123
    %p125 = scmp.le.s32.totalorder 1, %s9
    %p126 = scmp.lt.s32.totalorder %s9, 9
    %p127 = pnand %p125, %p126
    %p128 = pneg %p127
    // Predicated region
    $region9: #{up_conv_forward.1} parent=5 // pred_check
      _
    $region10: #{up_conv_forward.1} parent=5 // pred_check_branch
      %130 = sbr.rel (%p127) target = $region12
    $region11: #{up_conv_forward.1} parent=5 // pred_region
      %s131 = ssub.s32 %s9, 1
      // Predicated region
      $region13: #{up_conv_forward.1} parent=11 // pred_check
        %p132 = pneg %p68
      $region14: #{up_conv_forward.1} parent=11 // pred_check_branch
        %134 = sbr.rel (%p132) target = $region16
      $region15: #{up_conv_forward.1} parent=11 // pred_region
        _
      $region16: #{up_conv_forward.1} parent=11 // pred_fallthru
        _
      // Predicated region
      $region17: #{up_conv_forward.1} parent=11 // pred_check
        %p135 = pneg %p89
      $region18: #{up_conv_forward.1} parent=11 // pred_check_branch
        %137 = sbr.rel (%p135) target = $region20
      $region19: #{up_conv_forward.1} parent=11 // pred_region
        _
      $region20: #{up_conv_forward.1} parent=11 // pred_fallthru
        _
    $region12: #{up_conv_forward.1} parent=5 // pred_fallthru
      _
    %p138 = scmp.lt.s32.totalorder %s9, 8
    // Predicated region
    $region21: #{up_conv_forward.1} parent=5 // pred_check
      %p139 = pneg %p138
    $region22: #{up_conv_forward.1} parent=5 // pred_check_branch
      %141 = sbr.rel (%p139) target = $region24
    $region23: #{up_conv_forward.1} parent=5 // pred_region
      // Predicated region
      $region25: #{up_conv_forward.1} parent=23 // pred_check
        %p142 = pneg %p41
      $region26: #{up_conv_forward.1} parent=23 // pred_check_branch
        %144 = sbr.rel (%p142) target = $region28
      $region27: #{up_conv_forward.1} parent=23 // pred_region
        %p145 = scmp.lt.s32.totalorder %s16, 1
        %s146 = scalar_select %p145, %s16, 1
        %s147 = smul.addr %s146, 108
        %s148 = smul.addr %s147, 4
        %s149 = scalar_lea.vmem %s0, %s148
      $region28: #{up_conv_forward.1} parent=23 // pred_fallthru
        _
    $region24: #{up_conv_forward.1} parent=5 // pred_fallthru
      _
    %p150 = scmp.le.s32.totalorder 1, %s9
    %p151 = scmp.lt.s32.totalorder %s9, 9
    %p152 = pnand %p150, %p151
    %p153 = pneg %p152
    // Predicated region
    $region29: #{up_conv_forward.1} parent=5 // pred_check
      _
    $region30: #{up_conv_forward.1} parent=5 // pred_check_branch
      %155 = sbr.rel (%p152) target = $region32
    $region31: #{up_conv_forward.1} parent=5 // pred_region
      %s156 = ssub.s32 %s9, 1
      %p157 = scmp.lt.s32.totalorder %s18, 1
      %s158 = scalar_select %p157, %s18, 1
      %s159 = smul.addr %s158, 108
      %s160 = smul.addr %s159, 4
      %s161 = scalar_lea.vmem %s0, %s160
      %p162 = pneg %p47
      %p163 = pneg %p44
      %p164 = pneg %p68
      %p165 = pneg %p65
      %p166 = pneg %p89
      %p167 = pneg %p86
      %p168 = pneg %p117
      %p169 = pneg %p114
      %s170 = smul.u32 4, %s19
      %p171 = scmp.lt.s32.totalorder %s18, 1
      %s172 = scalar_select %p171, %s18, 1
      %p173 = scmp.lt.s32.totalorder %s170, 15
      %s174 = scalar_select %p173, %s170, 15
      %s175 = smul.addr %s174, 4
      %s176 = smul.addr %s172, 64
      %s177 = sadd.s32 %s175, %s176
      %s178 = smul.addr %s177, 4
      %s179 = scalar_lea.vmem %s3, %s178
      %p180 = scmp.lt.s32.totalorder %s18, 1
      %s181 = scalar_select %p180, %s18, 1
      %s182 = smul.addr %s181, 108
      %s183 = smul.addr %s182, 4
      %s184 = scalar_lea.vmem %s0, %s183
      %s185 = smul.u32 4, %s19
      %p186 = scmp.lt.s32.totalorder %s18, 1
      %s187 = scalar_select %p186, %s18, 1
      %p188 = scmp.lt.s32.totalorder %s185, 15
      %s189 = scalar_select %p188, %s185, 15
      %s190 = smul.addr %s189, 4
      %s191 = smul.addr %s187, 64
      %s192 = sadd.s32 %s190, %s191
      %s193 = smul.addr %s192, 4
      %s194 = scalar_lea.vmem %s3, %s193
      %s195 = smul.u32 4, %s19
      %s196 = smul.u32 %s19, 4
      %s197 = smul.u32 %s196, 6
      %s198 = smul.addr %s197, 4
      %s199 = scalar_lea.vmem %s184, %s198
      %v200 = vld [vmem:[%s199] sm:$0xff]
      %v201 = vld [vmem:[%s199 + $0x8] sm:$0xf]
      %v202 = vld [vmem:[%s199 + $0xc] sm:$0xff]
      %v203 = vld [vmem:[%s199 + $0x14] sm:$0xf]
      %v204 = vld [vmem:[%s199 + $0x18] sm:$0xff]
      %v205 = vld [vmem:[%s199 + $0x20] sm:$0xf]
      %v206 = vld [vmem:[%s199 + $0x24] sm:$0xff]
      %v207 = vld [vmem:[%s199 + $0x2c] sm:$0xf]
      %v208 = vld [vmem:[%s199 + $0x30] sm:$0xff]
      %v209 = vld [vmem:[%s199 + $0x38] sm:$0xf]
      %v210 = vld [vmem:[%s199 + $0x3c] sm:$0xff]
      %v211 = vld [vmem:[%s199 + $0x44] sm:$0xf]
      %v212 = vld [vmem:[%s199 + $0x48] sm:$0xff]
      %v213 = vld [vmem:[%s199 + $0x50] sm:$0xf]
      %v214 = vld [vmem:[%s199 + $0x54] sm:$0xff]
      %v215 = vld [vmem:[%s199 + $0x5c] sm:$0xf]
      %s216 = sadd.s32 %s196, 1
      %s217 = smul.u32 %s216, 6
      %s218 = smul.addr %s217, 4
      %s219 = scalar_lea.vmem %s184, %s218
      %v220 = vld [vmem:[%s219] sm:$0xff]
      %v221 = vld [vmem:[%s219 + $0x8] sm:$0xf]
      %v222 = vld [vmem:[%s219 + $0xc] sm:$0xff]
      %v223 = vld [vmem:[%s219 + $0x14] sm:$0xf]
      %v224 = vld [vmem:[%s219 + $0x18] sm:$0xff]
      %v225 = vld [vmem:[%s219 + $0x20] sm:$0xf]
      %v226 = vld [vmem:[%s219 + $0x24] sm:$0xff]
      %v227 = vld [vmem:[%s219 + $0x2c] sm:$0xf]
      %v228 = vld [vmem:[%s219 + $0x30] sm:$0xff]
      %v229 = vld [vmem:[%s219 + $0x38] sm:$0xf]
      %v230 = vld [vmem:[%s219 + $0x3c] sm:$0xff]
      %v231 = vld [vmem:[%s219 + $0x44] sm:$0xf]
      %v232 = vld [vmem:[%s219 + $0x48] sm:$0xff]
      %v233 = vld [vmem:[%s219 + $0x50] sm:$0xf]
      %v234 = vld [vmem:[%s219 + $0x54] sm:$0xff]
      %v235 = vld [vmem:[%s219 + $0x5c] sm:$0xf]
      %s236 = sadd.s32 %s196, 2
      %s237 = smul.u32 %s236, 6
      %s238 = smul.addr %s237, 4
      %s239 = scalar_lea.vmem %s184, %s238
      %v240 = vld [vmem:[%s239] sm:$0xff]
      %v241 = vld [vmem:[%s239 + $0x8] sm:$0xf]
      %v242 = vld [vmem:[%s239 + $0xc] sm:$0xff]
      %v243 = vld [vmem:[%s239 + $0x14] sm:$0xf]
      %v244 = vld [vmem:[%s239 + $0x18] sm:$0xff]
      %v245 = vld [vmem:[%s239 + $0x20] sm:$0xf]
      %v246 = vld [vmem:[%s239 + $0x24] sm:$0xff]
      %v247 = vld [vmem:[%s239 + $0x2c] sm:$0xf]
      %v248 = vld [vmem:[%s239 + $0x30] sm:$0xff]
      %v249 = vld [vmem:[%s239 + $0x38] sm:$0xf]
      %v250 = vld [vmem:[%s239 + $0x3c] sm:$0xff]
      %v251 = vld [vmem:[%s239 + $0x44] sm:$0xf]
      %v252 = vld [vmem:[%s239 + $0x48] sm:$0xff]
      %v253 = vld [vmem:[%s239 + $0x50] sm:$0xf]
      %v254 = vld [vmem:[%s239 + $0x54] sm:$0xff]
      %v255 = vld [vmem:[%s239 + $0x5c] sm:$0xf]
      %v272 = vunpack.c.l.b16 %v200
      %v273 = vunpack.c.h.b16 %v200
      %v274 = vunpack.c.l.b16 %v201
      %v275 = vunpack.c.l.b16 %v202
      %v276 = vunpack.c.h.b16 %v202
      %v277 = vunpack.c.l.b16 %v203
      %v278 = vunpack.c.l.b16 %v204
      %v279 = vunpack.c.h.b16 %v204
      %v280 = vunpack.c.l.b16 %v205
      %v281 = vunpack.c.l.b16 %v206
      %v282 = vunpack.c.h.b16 %v206
      %v283 = vunpack.c.l.b16 %v207
      %v284 = vunpack.c.l.b16 %v208
      %v285 = vunpack.c.h.b16 %v208
      %v286 = vunpack.c.l.b16 %v209
      %v287 = vunpack.c.l.b16 %v210
      %v288 = vunpack.c.h.b16 %v210
      %v289 = vunpack.c.l.b16 %v211
      %v290 = vunpack.c.l.b16 %v212
      %v291 = vunpack.c.h.b16 %v212
      %v292 = vunpack.c.l.b16 %v213
      %v293 = vunpack.c.l.b16 %v214
      %v294 = vunpack.c.h.b16 %v214
      %v295 = vunpack.c.l.b16 %v215
      %v296 = vpack.c.b16 %v275, %v272
      %v297 = vpack.c.b16 %v276, %v273
      %v298 = vpack.c.b16 %v277, %v274
      %v299 = vpack.c.b16 %v281, %v278
      %v300 = vpack.c.b16 %v282, %v279
      %v301 = vpack.c.b16 %v283, %v280
      %v302 = vpack.c.b16 %v287, %v284
      %v303 = vpack.c.b16 %v288, %v285
      %v304 = vpack.c.b16 %v289, %v286
      %v305 = vpack.c.b16 %v293, %v290
      %v306 = vpack.c.b16 %v294, %v291
      %v307 = vpack.c.b16 %v295, %v292
      %v336 = vunpack.c.l.b16 %v220
      %v337 = vunpack.c.h.b16 %v220
      %v338 = vunpack.c.l.b16 %v221
      %v339 = vunpack.c.l.b16 %v222
      %v340 = vunpack.c.h.b16 %v222
      %v341 = vunpack.c.l.b16 %v223
      %v342 = vunpack.c.l.b16 %v224
      %v343 = vunpack.c.h.b16 %v224
      %v344 = vunpack.c.l.b16 %v225
      %v345 = vunpack.c.l.b16 %v226
      %v346 = vunpack.c.h.b16 %v226
      %v347 = vunpack.c.l.b16 %v227
      %v348 = vunpack.c.l.b16 %v228
      %v349 = vunpack.c.h.b16 %v228
      %v350 = vunpack.c.l.b16 %v229
      %v351 = vunpack.c.l.b16 %v230
      %v352 = vunpack.c.h.b16 %v230
      %v353 = vunpack.c.l.b16 %v231
      %v354 = vunpack.c.l.b16 %v232
      %v355 = vunpack.c.h.b16 %v232
      %v356 = vunpack.c.l.b16 %v233
      %v357 = vunpack.c.l.b16 %v234
      %v358 = vunpack.c.h.b16 %v234
      %v359 = vunpack.c.l.b16 %v235
      %v360 = vpack.c.b16 %v339, %v336
      %v361 = vpack.c.b16 %v340, %v337
      %v362 = vpack.c.b16 %v341, %v338
      %v363 = vpack.c.b16 %v345, %v342
      %v364 = vpack.c.b16 %v346, %v343
      %v365 = vpack.c.b16 %v347, %v344
      %v366 = vpack.c.b16 %v351, %v348
      %v367 = vpack.c.b16 %v352, %v349
      %v368 = vpack.c.b16 %v353, %v350
      %v369 = vpack.c.b16 %v357, %v354
      %v370 = vpack.c.b16 %v358, %v355
      %v371 = vpack.c.b16 %v359, %v356
      %v400 = vunpack.c.l.b16 %v240
      %v401 = vunpack.c.h.b16 %v240
      %v402 = vunpack.c.l.b16 %v241
      %v403 = vunpack.c.l.b16 %v242
      %v404 = vunpack.c.h.b16 %v242
      %v405 = vunpack.c.l.b16 %v243
      %v406 = vunpack.c.l.b16 %v244
      %v407 = vunpack.c.h.b16 %v244
      %v408 = vunpack.c.l.b16 %v245
      %v409 = vunpack.c.l.b16 %v246
      %v410 = vunpack.c.h.b16 %v246
      %v411 = vunpack.c.l.b16 %v247
      %v412 = vunpack.c.l.b16 %v248
      %v413 = vunpack.c.h.b16 %v248
      %v414 = vunpack.c.l.b16 %v249
      %v415 = vunpack.c.l.b16 %v250
      %v416 = vunpack.c.h.b16 %v250
      %v417 = vunpack.c.l.b16 %v251
      %v418 = vunpack.c.l.b16 %v252
      %v419 = vunpack.c.h.b16 %v252
      %v420 = vunpack.c.l.b16 %v253
      %v421 = vunpack.c.l.b16 %v254
      %v422 = vunpack.c.h.b16 %v254
      %v423 = vunpack.c.l.b16 %v255
      %v424 = vpack.c.b16 %v403, %v400
      %v425 = vpack.c.b16 %v404, %v401
      %v426 = vpack.c.b16 %v405, %v402
      %v427 = vpack.c.b16 %v409, %v406
      %v428 = vpack.c.b16 %v410, %v407
      %v429 = vpack.c.b16 %v411, %v408
      %v430 = vpack.c.b16 %v415, %v412
      %v431 = vpack.c.b16 %v416, %v413
      %v432 = vpack.c.b16 %v417, %v414
      %v433 = vpack.c.b16 %v421, %v418
      %v434 = vpack.c.b16 %v422, %v419
      %v435 = vpack.c.b16 %v423, %v420
      %v448 = vld [vmem:[%s2] sm:$0x1]
      %v449 = vld [vmem:[%s1] sm:$0xf]
      %v450 = vld [vmem:[%s1 + $0x4] sm:$0xf]
      %v451 = vld [vmem:[%s1 + $0x8] sm:$0xf]
      %v452 = vld [vmem:[%s1 + $0xc] sm:$0xf]
      %v453 = vld [vmem:[%s1 + $0x10] sm:$0xf]
      %v454 = vld [vmem:[%s1 + $0x14] sm:$0xf]
      %v455 = vld [vmem:[%s1 + $0x18] sm:$0xf]
      %v456 = vld [vmem:[%s1 + $0x1c] sm:$0xf]
      %v457 = vld [vmem:[%s1 + $0x20] sm:$0xf]
      %v458 = vld [vmem:[%s1 + $0x24] sm:$0xf]
      %v459 = vld [vmem:[%s1 + $0x28] sm:$0xf]
      %v460 = vld [vmem:[%s1 + $0x2c] sm:$0xf]
      %v461 = vld [vmem:[%s1 + $0x30] sm:$0xf]
      %v462 = vld [vmem:[%s1 + $0x34] sm:$0xf]
      %v463 = vld [vmem:[%s1 + $0x38] sm:$0xf]
      %v464 = vld [vmem:[%s1 + $0x3c] sm:$0xf]
      %v465 = vld [vmem:[%s1 + $0x40] sm:$0xf]
      %v466 = vld [vmem:[%s1 + $0x44] sm:$0xf]
      %v467 = vld [vmem:[%s1 + $0x48] sm:$0xf]
      %v468 = vld [vmem:[%s1 + $0x4c] sm:$0xf]
      %v469 = vld [vmem:[%s1 + $0x50] sm:$0xf]
      %v470 = vld [vmem:[%s1 + $0x54] sm:$0xf]
      %v471 = vld [vmem:[%s1 + $0x58] sm:$0xf]
      %v472 = vld [vmem:[%s1 + $0x5c] sm:$0xf]
      %v473 = vld [vmem:[%s1 + $0x60] sm:$0xf]
      %v474 = vld [vmem:[%s1 + $0x64] sm:$0xf]
      %v475 = vld [vmem:[%s1 + $0x68] sm:$0xf]
      %v476 = vld [vmem:[%s1 + $0x6c] sm:$0xf]
      %v477 = vld [vmem:[%s1 + $0x70] sm:$0xf]
      %v478 = vld [vmem:[%s1 + $0x74] sm:$0xf]
      %v479 = vld [vmem:[%s1 + $0x78] sm:$0xf]
      %v480 = vld [vmem:[%s1 + $0x7c] sm:$0xf]
      %v481 = vld [vmem:[%s1 + $0x80] sm:$0xf]
      %v482 = vld [vmem:[%s1 + $0x84] sm:$0xf]
      %v483 = vld [vmem:[%s1 + $0x88] sm:$0xf]
      %v484 = vld [vmem:[%s1 + $0x8c] sm:$0xf]
      %v485 = vld [vmem:[%s1 + $0x90] sm:$0xf]
      %v486 = vld [vmem:[%s1 + $0x94] sm:$0xf]
      %v487 = vld [vmem:[%s1 + $0x98] sm:$0xf]
      %v488 = vld [vmem:[%s1 + $0x9c] sm:$0xf]
      %v489 = vld [vmem:[%s1 + $0xa0] sm:$0xf]
      %v490 = vld [vmem:[%s1 + $0xa4] sm:$0xf]
      %v491 = vld [vmem:[%s1 + $0xa8] sm:$0xf]
      %v492 = vld [vmem:[%s1 + $0xac] sm:$0xf]
      %v493 = vld [vmem:[%s1 + $0xb0] sm:$0xf]
      %v494 = vld [vmem:[%s1 + $0xb4] sm:$0xf]
      %v495 = vld [vmem:[%s1 + $0xb8] sm:$0xf]
      %v496 = vld [vmem:[%s1 + $0xbc] sm:$0xf]
      %v497 = vld [vmem:[%s1 + $0xc0] sm:$0xf]
      %v498 = vld [vmem:[%s1 + $0xc4] sm:$0xf]
      %v499 = vld [vmem:[%s1 + $0xc8] sm:$0xf]
      %v500 = vld [vmem:[%s1 + $0xcc] sm:$0xf]
      %v501 = vld [vmem:[%s1 + $0xd0] sm:$0xf]
      %v502 = vld [vmem:[%s1 + $0xd4] sm:$0xf]
      %v503 = vld [vmem:[%s1 + $0xd8] sm:$0xf]
      %v504 = vld [vmem:[%s1 + $0xdc] sm:$0xf]
      %v505 = vld [vmem:[%s1 + $0xe0] sm:$0xf]
      %v506 = vld [vmem:[%s1 + $0xe4] sm:$0xf]
      %v507 = vld [vmem:[%s1 + $0xe8] sm:$0xf]
      %v508 = vld [vmem:[%s1 + $0xec] sm:$0xf]
      %v509 = vld [vmem:[%s1 + $0xf0] sm:$0xf]
      %v510 = vld [vmem:[%s1 + $0xf4] sm:$0xf]
      %v511 = vld [vmem:[%s1 + $0xf8] sm:$0xf]
      %v512 = vld [vmem:[%s1 + $0xfc] sm:$0xf]
      %v513 = vld [vmem:[%s1 + $0x100] sm:$0xf]
      %v514 = vld [vmem:[%s1 + $0x104] sm:$0xf]
      %v515 = vld [vmem:[%s1 + $0x108] sm:$0xf]
      %v516 = vld [vmem:[%s1 + $0x10c] sm:$0xf]
      %v517 = vld [vmem:[%s1 + $0x110] sm:$0xf]
      %v518 = vld [vmem:[%s1 + $0x114] sm:$0xf]
      %v519 = vld [vmem:[%s1 + $0x118] sm:$0xf]
      %v520 = vld [vmem:[%s1 + $0x11c] sm:$0xf]
      %v521 = vld [vmem:[%s1 + $0x120] sm:$0xf]
      %v522 = vld [vmem:[%s1 + $0x124] sm:$0xf]
      %v523 = vld [vmem:[%s1 + $0x128] sm:$0xf]
      %v524 = vld [vmem:[%s1 + $0x12c] sm:$0xf]
      %v525 = vld [vmem:[%s1 + $0x130] sm:$0xf]
      %v526 = vld [vmem:[%s1 + $0x134] sm:$0xf]
      %v527 = vld [vmem:[%s1 + $0x138] sm:$0xf]
      %v528 = vld [vmem:[%s1 + $0x13c] sm:$0xf]
      %v529 = vld [vmem:[%s1 + $0x140] sm:$0xf]
      %v530 = vld [vmem:[%s1 + $0x144] sm:$0xf]
      %v531 = vld [vmem:[%s1 + $0x148] sm:$0xf]
      %v532 = vld [vmem:[%s1 + $0x14c] sm:$0xf]
      %v533 = vld [vmem:[%s1 + $0x150] sm:$0xf]
      %v534 = vld [vmem:[%s1 + $0x154] sm:$0xf]
      %v535 = vld [vmem:[%s1 + $0x158] sm:$0xf]
      %v536 = vld [vmem:[%s1 + $0x15c] sm:$0xf]
      %v537 = vld [vmem:[%s1 + $0x160] sm:$0xf]
      %v538 = vld [vmem:[%s1 + $0x164] sm:$0xf]
      %v539 = vld [vmem:[%s1 + $0x168] sm:$0xf]
      %v540 = vld [vmem:[%s1 + $0x16c] sm:$0xf]
      %v541 = vld [vmem:[%s1 + $0x170] sm:$0xf]
      %v542 = vld [vmem:[%s1 + $0x174] sm:$0xf]
      %v543 = vld [vmem:[%s1 + $0x178] sm:$0xf]
      %v544 = vld [vmem:[%s1 + $0x17c] sm:$0xf]
      %v546 = vperm.slane %v448, 0
      %v644 = vunpack.c.l.b16 %v449
      %v645 = vunpack.c.l.b16 %v450
      %v646 = vunpack.c.l.b16 %v451
      %v647 = vunpack.c.l.b16 %v452
      %v648 = vunpack.c.l.b16 %v453
      %v649 = vunpack.c.l.b16 %v454
      %v650 = vunpack.c.l.b16 %v455
      %v651 = vunpack.c.l.b16 %v456
      %v652 = vunpack.c.l.b16 %v457
      %v653 = vunpack.c.l.b16 %v458
      %v654 = vunpack.c.l.b16 %v459
      %v655 = vunpack.c.l.b16 %v460
      %v656 = vunpack.c.l.b16 %v461
      %v657 = vunpack.c.l.b16 %v462
      %v658 = vunpack.c.l.b16 %v463
      %v659 = vunpack.c.l.b16 %v464
      %v660 = vunpack.c.l.b16 %v465
      %v661 = vunpack.c.l.b16 %v466
      %v662 = vunpack.c.l.b16 %v467
      %v663 = vunpack.c.l.b16 %v468
      %v664 = vunpack.c.l.b16 %v469
      %v665 = vunpack.c.l.b16 %v470
      %v666 = vunpack.c.l.b16 %v471
      %v667 = vunpack.c.l.b16 %v472
      %v668 = vunpack.c.l.b16 %v473
      %v669 = vunpack.c.l.b16 %v474
      %v670 = vunpack.c.l.b16 %v475
      %v671 = vunpack.c.l.b16 %v476
      %v672 = vunpack.c.l.b16 %v477
      %v673 = vunpack.c.l.b16 %v478
      %v674 = vunpack.c.l.b16 %v479
      %v675 = vunpack.c.l.b16 %v480
      %v676 = vunpack.c.l.b16 %v481
      %v677 = vunpack.c.l.b16 %v482
      %v678 = vunpack.c.l.b16 %v483
      %v679 = vunpack.c.l.b16 %v484
      %v680 = vunpack.c.l.b16 %v485
      %v681 = vunpack.c.l.b16 %v486
      %v682 = vunpack.c.l.b16 %v487
      %v683 = vunpack.c.l.b16 %v488
      %v684 = vunpack.c.l.b16 %v489
      %v685 = vunpack.c.l.b16 %v490
      %v686 = vunpack.c.l.b16 %v491
      %v687 = vunpack.c.l.b16 %v492
      %v688 = vunpack.c.l.b16 %v493
      %v689 = vunpack.c.l.b16 %v494
      %v690 = vunpack.c.l.b16 %v495
      %v691 = vunpack.c.l.b16 %v496
      %v692 = vunpack.c.l.b16 %v497
      %v693 = vunpack.c.l.b16 %v498
      %v694 = vunpack.c.l.b16 %v499
      %v695 = vunpack.c.l.b16 %v500
      %v696 = vunpack.c.l.b16 %v501
      %v697 = vunpack.c.l.b16 %v502
      %v698 = vunpack.c.l.b16 %v503
      %v699 = vunpack.c.l.b16 %v504
      %v700 = vunpack.c.l.b16 %v505
      %v701 = vunpack.c.l.b16 %v506
      %v702 = vunpack.c.l.b16 %v507
      %v703 = vunpack.c.l.b16 %v508
      %v704 = vunpack.c.l.b16 %v509
      %v705 = vunpack.c.l.b16 %v510
      %v706 = vunpack.c.l.b16 %v511
      %v707 = vunpack.c.l.b16 %v512
      %v708 = vunpack.c.l.b16 %v513
      %v709 = vunpack.c.l.b16 %v514
      %v710 = vunpack.c.l.b16 %v515
      %v711 = vunpack.c.l.b16 %v516
      %v712 = vunpack.c.l.b16 %v517
      %v713 = vunpack.c.l.b16 %v518
      %v714 = vunpack.c.l.b16 %v519
      %v715 = vunpack.c.l.b16 %v520
      %v716 = vunpack.c.l.b16 %v521
      %v717 = vunpack.c.l.b16 %v522
      %v718 = vunpack.c.l.b16 %v523
      %v719 = vunpack.c.l.b16 %v524
      %v720 = vunpack.c.l.b16 %v525
      %v721 = vunpack.c.l.b16 %v526
      %v722 = vunpack.c.l.b16 %v527
      %v723 = vunpack.c.l.b16 %v528
      %v724 = vunpack.c.l.b16 %v529
      %v725 = vunpack.c.l.b16 %v530
      %v726 = vunpack.c.l.b16 %v531
      %v727 = vunpack.c.l.b16 %v532
      %v728 = vunpack.c.l.b16 %v533
      %v729 = vunpack.c.l.b16 %v534
      %v730 = vunpack.c.l.b16 %v535
      %v731 = vunpack.c.l.b16 %v536
      %v732 = vunpack.c.l.b16 %v537
      %v733 = vunpack.c.l.b16 %v538
      %v734 = vunpack.c.l.b16 %v539
      %v735 = vunpack.c.l.b16 %v540
      %v736 = vunpack.c.l.b16 %v541
      %v737 = vunpack.c.l.b16 %v542
      %v738 = vunpack.c.l.b16 %v543
      %v739 = vunpack.c.l.b16 %v544
      %v740 = vpack.c.b16 %v645, %v644
      %v741 = vpack.c.b16 %v647, %v646
      %v742 = vpack.c.b16 %v649, %v648
      %v743 = vpack.c.b16 %v651, %v650
      %v744 = vpack.c.b16 %v653, %v652
      %v745 = vpack.c.b16 %v655, %v654
      %v746 = vpack.c.b16 %v657, %v656
      %v747 = vpack.c.b16 %v659, %v658
      %v748 = vpack.c.b16 %v661, %v660
      %v749 = vpack.c.b16 %v663, %v662
      %v750 = vpack.c.b16 %v665, %v664
      %v751 = vpack.c.b16 %v667, %v666
      %v752 = vpack.c.b16 %v669, %v668
      %v753 = vpack.c.b16 %v671, %v670
      %v754 = vpack.c.b16 %v673, %v672
      %v755 = vpack.c.b16 %v675, %v674
      %v756 = vpack.c.b16 %v677, %v676
      %v757 = vpack.c.b16 %v679, %v678
      %v758 = vpack.c.b16 %v681, %v680
      %v759 = vpack.c.b16 %v683, %v682
      %v760 = vpack.c.b16 %v685, %v684
      %v761 = vpack.c.b16 %v687, %v686
      %v762 = vpack.c.b16 %v689, %v688
      %v763 = vpack.c.b16 %v691, %v690
      %v764 = vpack.c.b16 %v693, %v692
      %v765 = vpack.c.b16 %v695, %v694
      %v766 = vpack.c.b16 %v697, %v696
      %v767 = vpack.c.b16 %v699, %v698
      %v768 = vpack.c.b16 %v701, %v700
      %v769 = vpack.c.b16 %v703, %v702
      %v770 = vpack.c.b16 %v705, %v704
      %v771 = vpack.c.b16 %v707, %v706
      %v772 = vpack.c.b16 %v709, %v708
      %v773 = vpack.c.b16 %v711, %v710
      %v774 = vpack.c.b16 %v713, %v712
      %v775 = vpack.c.b16 %v715, %v714
      %v776 = vpack.c.b16 %v717, %v716
      %v777 = vpack.c.b16 %v719, %v718
      %v778 = vpack.c.b16 %v721, %v720
      %v779 = vpack.c.b16 %v723, %v722
      %v780 = vpack.c.b16 %v725, %v724
      %v781 = vpack.c.b16 %v727, %v726
      %v782 = vpack.c.b16 %v729, %v728
      %v783 = vpack.c.b16 %v731, %v730
      %v784 = vpack.c.b16 %v733, %v732
      %v785 = vpack.c.b16 %v735, %v734
      %v786 = vpack.c.b16 %v737, %v736
      %v787 = vpack.c.b16 %v739, %v738
      %836 = vmatpush.bf16.msra.mxu0 %v747
      %837 = vmatpush.bf16.msra.mxu0 %v746
      %838 = vmatpush.bf16.msra.mxu0 %v745
      %839 = vmatpush.bf16.msra.mxu0 %v744
      %840 = vmatpush.bf16.msra.mxu0 %v743
      %841 = vmatpush.bf16.msra.mxu0 %v742
      %842 = vmatpush.bf16.msra.mxu0 %v741
      %843 = vmatpush.bf16.msra.mxu0 %v740
      %844 = vmatmul.bf16.gmra.mxu0 %v296
      %v845 = vpop.f32.mrf.mxu0
      %v846 = vadd.f32 %v546, %v845
      %v847 = vpop.f32.mrf.mxu0
      %v848 = vadd.f32 %v546, %v847
      %849 = vmatmul.bf16.gmra.mxu0 %v299
      %v850 = vpop.f32.mrf.mxu0
      %v851 = vadd.f32 %v546, %v850
      %v852 = vpop.f32.mrf.mxu0
      %v853 = vadd.f32 %v546, %v852
      %854 = vmatmul.bf16.gmra.mxu0 %v302
      %v855 = vpop.f32.mrf.mxu0
      %v856 = vadd.f32 %v546, %v855
      %v857 = vpop.f32.mrf.mxu0
      %v858 = vadd.f32 %v546, %v857
      %859 = vmatmul.bf16.gmra.mxu0 %v305
      %v860 = vpop.f32.mrf.mxu0
      %v861 = vadd.f32 %v546, %v860
      %v862 = vpop.f32.mrf.mxu0
      %v863 = vadd.f32 %v546, %v862
      %864 = vdwg.mxu0
      %865 = vmatpush.bf16.msra.mxu0 %v755
      %866 = vmatpush.bf16.msra.mxu0 %v754
      %867 = vmatpush.bf16.msra.mxu0 %v753
      %868 = vmatpush.bf16.msra.mxu0 %v752
      %869 = vmatpush.bf16.msra.mxu0 %v751
      %870 = vmatpush.bf16.msra.mxu0 %v750
      %871 = vmatpush.bf16.msra.mxu0 %v749
      %872 = vmatpush.bf16.msra.mxu0 %v748
      %873 = vmatmul.bf16.gmra.mxu0 %v297
      %v874 = vpop.f32.mrf.mxu0
      %v875 = vadd.f32 %v846, %v874
      %v876 = vpop.f32.mrf.mxu0
      %v877 = vadd.f32 %v848, %v876
      %878 = vmatmul.bf16.gmra.mxu0 %v300
      %v879 = vpop.f32.mrf.mxu0
      %v880 = vadd.f32 %v851, %v879
      %v881 = vpop.f32.mrf.mxu0
      %v882 = vadd.f32 %v853, %v881
      %883 = vmatmul.bf16.gmra.mxu0 %v303
      %v884 = vpop.f32.mrf.mxu0
      %v885 = vadd.f32 %v856, %v884
      %v886 = vpop.f32.mrf.mxu0
      %v887 = vadd.f32 %v858, %v886
      %888 = vmatmul.bf16.gmra.mxu0 %v306
      %v889 = vpop.f32.mrf.mxu0
      %v890 = vadd.f32 %v861, %v889
      %v891 = vpop.f32.mrf.mxu0
      %v892 = vadd.f32 %v863, %v891
      %893 = vdwg.mxu0
      %894 = vmatpush.bf16.msra.mxu0 %v763
      %895 = vmatpush.bf16.msra.mxu0 %v762
      %896 = vmatpush.bf16.msra.mxu0 %v761
      %897 = vmatpush.bf16.msra.mxu0 %v760
      %898 = vmatpush.bf16.msra.mxu0 %v759
      %899 = vmatpush.bf16.msra.mxu0 %v758
      %900 = vmatpush.bf16.msra.mxu0 %v757
      %901 = vmatpush.bf16.msra.mxu0 %v756
      %902 = vmatmul.bf16.gmra.mxu0 %v298
      %v903 = vpop.f32.mrf.mxu0
      %v904 = vadd.f32 %v875, %v903
      %v905 = vpop.f32.mrf.mxu0
      %v906 = vadd.f32 %v877, %v905
      %907 = vmatmul.bf16.gmra.mxu0 %v301
      %v908 = vpop.f32.mrf.mxu0
      %v909 = vadd.f32 %v880, %v908
      %v910 = vpop.f32.mrf.mxu0
      %v911 = vadd.f32 %v882, %v910
      %912 = vmatmul.bf16.gmra.mxu0 %v304
      %v913 = vpop.f32.mrf.mxu0
      %v914 = vadd.f32 %v885, %v913
      %v915 = vpop.f32.mrf.mxu0
      %v916 = vadd.f32 %v887, %v915
      %917 = vmatmul.bf16.gmra.mxu0 %v307
      %v918 = vpop.f32.mrf.mxu0
      %v919 = vadd.f32 %v890, %v918
      %v920 = vpop.f32.mrf.mxu0
      %v921 = vadd.f32 %v892, %v920
      %922 = vdwg.mxu0
      %923 = vmatpush.bf16.msra.mxu0 %v771
      %924 = vmatpush.bf16.msra.mxu0 %v770
      %925 = vmatpush.bf16.msra.mxu0 %v769
      %926 = vmatpush.bf16.msra.mxu0 %v768
      %927 = vmatpush.bf16.msra.mxu0 %v767
      %928 = vmatpush.bf16.msra.mxu0 %v766
      %929 = vmatpush.bf16.msra.mxu0 %v765
      %930 = vmatpush.bf16.msra.mxu0 %v764
      %931 = vmatmul.bf16.gmra.mxu0 %v360
      %v932 = vpop.f32.mrf.mxu0
      %v933 = vadd.f32 %v904, %v932
      %v934 = vpop.f32.mrf.mxu0
      %v935 = vadd.f32 %v906, %v934
      %936 = vmatmul.bf16.gmra.mxu0 %v363
      %v937 = vpop.f32.mrf.mxu0
      %v938 = vadd.f32 %v909, %v937
      %v939 = vpop.f32.mrf.mxu0
      %v940 = vadd.f32 %v911, %v939
      %941 = vmatmul.bf16.gmra.mxu0 %v366
      %v942 = vpop.f32.mrf.mxu0
      %v943 = vadd.f32 %v914, %v942
      %v944 = vpop.f32.mrf.mxu0
      %v945 = vadd.f32 %v916, %v944
      %946 = vmatmul.bf16.gmra.mxu0 %v369
      %v947 = vpop.f32.mrf.mxu0
      %v948 = vadd.f32 %v919, %v947
      %v949 = vpop.f32.mrf.mxu0
      %v950 = vadd.f32 %v921, %v949
      %951 = vdwg.mxu0
      %952 = vmatpush.bf16.msra.mxu0 %v779
      %953 = vmatpush.bf16.msra.mxu0 %v778
      %954 = vmatpush.bf16.msra.mxu0 %v777
      %955 = vmatpush.bf16.msra.mxu0 %v776
      %956 = vmatpush.bf16.msra.mxu0 %v775
      %957 = vmatpush.bf16.msra.mxu0 %v774
      %958 = vmatpush.bf16.msra.mxu0 %v773
      %959 = vmatpush.bf16.msra.mxu0 %v772
      %960 = vmatmul.bf16.gmra.mxu0 %v361
      %v961 = vpop.f32.mrf.mxu0
      %v962 = vadd.f32 %v933, %v961
      %v963 = vpop.f32.mrf.mxu0
      %v964 = vadd.f32 %v935, %v963
      %965 = vmatmul.bf16.gmra.mxu0 %v364
      %v966 = vpop.f32.mrf.mxu0
      %v967 = vadd.f32 %v938, %v966
      %v968 = vpop.f32.mrf.mxu0
      %v969 = vadd.f32 %v940, %v968
      %970 = vmatmul.bf16.gmra.mxu0 %v367
      %v971 = vpop.f32.mrf.mxu0
      %v972 = vadd.f32 %v943, %v971
      %v973 = vpop.f32.mrf.mxu0
      %v974 = vadd.f32 %v945, %v973
      %975 = vmatmul.bf16.gmra.mxu0 %v370
      %v976 = vpop.f32.mrf.mxu0
      %v977 = vadd.f32 %v948, %v976
      %v978 = vpop.f32.mrf.mxu0
      %v979 = vadd.f32 %v950, %v978
      %980 = vdwg.mxu0
      %981 = vmatpush.bf16.msra.mxu0 %v787
      %982 = vmatpush.bf16.msra.mxu0 %v786
      %983 = vmatpush.bf16.msra.mxu0 %v785
      %984 = vmatpush.bf16.msra.mxu0 %v784
      %985 = vmatpush.bf16.msra.mxu0 %v783
      %986 = vmatpush.bf16.msra.mxu0 %v782
      %987 = vmatpush.bf16.msra.mxu0 %v781
      %988 = vmatpush.bf16.msra.mxu0 %v780
      %989 = vmatmul.bf16.gmra.mxu0 %v362
      %v990 = vpop.f32.mrf.mxu0
      %v991 = vadd.f32 %v962, %v990
      %v992 = vpop.f32.mrf.mxu0
      %v993 = vadd.f32 %v964, %v992
      %994 = vmatmul.bf16.gmra.mxu0 %v365
      %v995 = vpop.f32.mrf.mxu0
      %v996 = vadd.f32 %v967, %v995
      %v997 = vpop.f32.mrf.mxu0
      %v998 = vadd.f32 %v969, %v997
      %999 = vmatmul.bf16.gmra.mxu0 %v368
      %v1000 = vpop.f32.mrf.mxu0
      %v1001 = vadd.f32 %v972, %v1000
      %v1002 = vpop.f32.mrf.mxu0
      %v1003 = vadd.f32 %v974, %v1002
      %1004 = vmatmul.bf16.gmra.mxu0 %v371
      %v1005 = vpop.f32.mrf.mxu0
      %v1006 = vadd.f32 %v977, %v1005
      %v1007 = vpop.f32.mrf.mxu0
      %v1008 = vadd.f32 %v979, %v1007
      %1009 = vdwg.mxu0
      %v1010 = vmax.f32 %v991, 0.0
      %v1011 = vmax.f32 %v993, 0.0
      %v1012 = vmax.f32 %v996, 0.0
      %v1013 = vmax.f32 %v998, 0.0
      %v1014 = vmax.f32 %v1001, 0.0
      %v1015 = vmax.f32 %v1003, 0.0
      %v1016 = vmax.f32 %v1006, 0.0
      %v1017 = vmax.f32 %v1008, 0.0
      %v1018 = vpack.c.bf16 %v1010, %v1010
      %v1019 = vpack.c.bf16 %v1011, %v1011
      %v1020 = vpack.c.bf16 %v1012, %v1012
      %v1021 = vpack.c.bf16 %v1013, %v1013
      %v1022 = vpack.c.bf16 %v1014, %v1014
      %v1023 = vpack.c.bf16 %v1015, %v1015
      %v1024 = vpack.c.bf16 %v1016, %v1016
      %v1025 = vpack.c.bf16 %v1017, %v1017
      %1026 = vst [vmem:[%s194] sm:$0xf] %v1018
      %1027 = vst [vmem:[%s194 + $0x4] sm:$0xf] %v1019
      %1028 = vst [vmem:[%s194 + $0x10] sm:$0xf] %v1020
      %1029 = vst [vmem:[%s194 + $0x14] sm:$0xf] %v1021
      %1030 = vst [vmem:[%s194 + $0x20] sm:$0xf] %v1022
      %1031 = vst [vmem:[%s194 + $0x24] sm:$0xf] %v1023
      %1032 = vst [vmem:[%s194 + $0x30] sm:$0xf] %v1024
      %1033 = vst [vmem:[%s194 + $0x34] sm:$0xf] %v1025
      %s1034 = scalar_lea.vmem %s1, 384
      %v1035 = vld [vmem:[%s1034] sm:$0xf]
      %v1036 = vld [vmem:[%s1034 + $0x4] sm:$0xf]
      %v1037 = vld [vmem:[%s1034 + $0x8] sm:$0xf]
      %v1038 = vld [vmem:[%s1034 + $0xc] sm:$0xf]
      %v1039 = vld [vmem:[%s1034 + $0x10] sm:$0xf]
      %v1040 = vld [vmem:[%s1034 + $0x14] sm:$0xf]
      %v1041 = vld [vmem:[%s1034 + $0x18] sm:$0xf]
      %v1042 = vld [vmem:[%s1034 + $0x1c] sm:$0xf]
      %v1043 = vld [vmem:[%s1034 + $0x20] sm:$0xf]
      %v1044 = vld [vmem:[%s1034 + $0x24] sm:$0xf]
      %v1045 = vld [vmem:[%s1034 + $0x28] sm:$0xf]
      %v1046 = vld [vmem:[%s1034 + $0x2c] sm:$0xf]
      %v1047 = vld [vmem:[%s1034 + $0x30] sm:$0xf]
      %v1048 = vld [vmem:[%s1034 + $0x34] sm:$0xf]
      %v1049 = vld [vmem:[%s1034 + $0x38] sm:$0xf]
      %v1050 = vld [vmem:[%s1034 + $0x3c] sm:$0xf]
      %v1051 = vld [vmem:[%s1034 + $0x40] sm:$0xf]
      %v1052 = vld [vmem:[%s1034 + $0x44] sm:$0xf]
      %v1053 = vld [vmem:[%s1034 + $0x48] sm:$0xf]
      %v1054 = vld [vmem:[%s1034 + $0x4c] sm:$0xf]
      %v1055 = vld [vmem:[%s1034 + $0x50] sm:$0xf]
      %v1056 = vld [vmem:[%s1034 + $0x54] sm:$0xf]
      %v1057 = vld [vmem:[%s1034 + $0x58] sm:$0xf]
      %v1058 = vld [vmem:[%s1034 + $0x5c] sm:$0xf]
      %v1059 = vld [vmem:[%s1034 + $0x60] sm:$0xf]
      %v1060 = vld [vmem:[%s1034 + $0x64] sm:$0xf]
      %v1061 = vld [vmem:[%s1034 + $0x68] sm:$0xf]
      %v1062 = vld [vmem:[%s1034 + $0x6c] sm:$0xf]
      %v1063 = vld [vmem:[%s1034 + $0x70] sm:$0xf]
      %v1064 = vld [vmem:[%s1034 + $0x74] sm:$0xf]
      %v1065 = vld [vmem:[%s1034 + $0x78] sm:$0xf]
      %v1066 = vld [vmem:[%s1034 + $0x7c] sm:$0xf]
      %v1067 = vld [vmem:[%s1034 + $0x80] sm:$0xf]
      %v1068 = vld [vmem:[%s1034 + $0x84] sm:$0xf]
      %v1069 = vld [vmem:[%s1034 + $0x88] sm:$0xf]
      %v1070 = vld [vmem:[%s1034 + $0x8c] sm:$0xf]
      %v1071 = vld [vmem:[%s1034 + $0x90] sm:$0xf]
      %v1072 = vld [vmem:[%s1034 + $0x94] sm:$0xf]
      %v1073 = vld [vmem:[%s1034 + $0x98] sm:$0xf]
      %v1074 = vld [vmem:[%s1034 + $0x9c] sm:$0xf]
      %v1075 = vld [vmem:[%s1034 + $0xa0] sm:$0xf]
      %v1076 = vld [vmem:[%s1034 + $0xa4] sm:$0xf]
      %v1077 = vld [vmem:[%s1034 + $0xa8] sm:$0xf]
      %v1078 = vld [vmem:[%s1034 + $0xac] sm:$0xf]
      %v1079 = vld [vmem:[%s1034 + $0xb0] sm:$0xf]
      %v1080 = vld [vmem:[%s1034 + $0xb4] sm:$0xf]
      %v1081 = vld [vmem:[%s1034 + $0xb8] sm:$0xf]
      %v1082 = vld [vmem:[%s1034 + $0xbc] sm:$0xf]
      %v1083 = vld [vmem:[%s1034 + $0xc0] sm:$0xf]
      %v1084 = vld [vmem:[%s1034 + $0xc4] sm:$0xf]
      %v1085 = vld [vmem:[%s1034 + $0xc8] sm:$0xf]
      %v1086 = vld [vmem:[%s1034 + $0xcc] sm:$0xf]
      %v1087 = vld [vmem:[%s1034 + $0xd0] sm:$0xf]
      %v1088 = vld [vmem:[%s1034 + $0xd4] sm:$0xf]
      %v1089 = vld [vmem:[%s1034 + $0xd8] sm:$0xf]
      %v1090 = vld [vmem:[%s1034 + $0xdc] sm:$0xf]
      %v1091 = vld [vmem:[%s1034 + $0xe0] sm:$0xf]
      %v1092 = vld [vmem:[%s1034 + $0xe4] sm:$0xf]
      %v1093 = vld [vmem:[%s1034 + $0xe8] sm:$0xf]
      %v1094 = vld [vmem:[%s1034 + $0xec] sm:$0xf]
      %v1095 = vld [vmem:[%s1034 + $0xf0] sm:$0xf]
      %v1096 = vld [vmem:[%s1034 + $0xf4] sm:$0xf]
      %v1097 = vld [vmem:[%s1034 + $0xf8] sm:$0xf]
      %v1098 = vld [vmem:[%s1034 + $0xfc] sm:$0xf]
      %v1099 = vld [vmem:[%s1034 + $0x100] sm:$0xf]
      %v1100 = vld [vmem:[%s1034 + $0x104] sm:$0xf]
      %v1101 = vld [vmem:[%s1034 + $0x108] sm:$0xf]
      %v1102 = vld [vmem:[%s1034 + $0x10c] sm:$0xf]
      %v1103 = vld [vmem:[%s1034 + $0x110] sm:$0xf]
      %v1104 = vld [vmem:[%s1034 + $0x114] sm:$0xf]
      %v1105 = vld [vmem:[%s1034 + $0x118] sm:$0xf]
      %v1106 = vld [vmem:[%s1034 + $0x11c] sm:$0xf]
      %v1107 = vld [vmem:[%s1034 + $0x120] sm:$0xf]
      %v1108 = vld [vmem:[%s1034 + $0x124] sm:$0xf]
      %v1109 = vld [vmem:[%s1034 + $0x128] sm:$0xf]
      %v1110 = vld [vmem:[%s1034 + $0x12c] sm:$0xf]
      %v1111 = vld [vmem:[%s1034 + $0x130] sm:$0xf]
      %v1112 = vld [vmem:[%s1034 + $0x134] sm:$0xf]
      %v1113 = vld [vmem:[%s1034 + $0x138] sm:$0xf]
      %v1114 = vld [vmem:[%s1034 + $0x13c] sm:$0xf]
      %v1115 = vld [vmem:[%s1034 + $0x140] sm:$0xf]
      %v1116 = vld [vmem:[%s1034 + $0x144] sm:$0xf]
      %v1117 = vld [vmem:[%s1034 + $0x148] sm:$0xf]
      %v1118 = vld [vmem:[%s1034 + $0x14c] sm:$0xf]
      %v1119 = vld [vmem:[%s1034 + $0x150] sm:$0xf]
      %v1120 = vld [vmem:[%s1034 + $0x154] sm:$0xf]
      %v1121 = vld [vmem:[%s1034 + $0x158] sm:$0xf]
      %v1122 = vld [vmem:[%s1034 + $0x15c] sm:$0xf]
      %v1123 = vld [vmem:[%s1034 + $0x160] sm:$0xf]
      %v1124 = vld [vmem:[%s1034 + $0x164] sm:$0xf]
      %v1125 = vld [vmem:[%s1034 + $0x168] sm:$0xf]
      %v1126 = vld [vmem:[%s1034 + $0x16c] sm:$0xf]
      %v1127 = vld [vmem:[%s1034 + $0x170] sm:$0xf]
      %v1128 = vld [vmem:[%s1034 + $0x174] sm:$0xf]
      %v1129 = vld [vmem:[%s1034 + $0x178] sm:$0xf]
      %v1130 = vld [vmem:[%s1034 + $0x17c] sm:$0xf]
      %v1227 = vunpack.c.l.b16 %v1035
      %v1228 = vunpack.c.l.b16 %v1036
      %v1229 = vunpack.c.l.b16 %v1037
      %v1230 = vunpack.c.l.b16 %v1038
      %v1231 = vunpack.c.l.b16 %v1039
      %v1232 = vunpack.c.l.b16 %v1040
      %v1233 = vunpack.c.l.b16 %v1041
      %v1234 = vunpack.c.l.b16 %v1042
      %v1235 = vunpack.c.l.b16 %v1043
      %v1236 = vunpack.c.l.b16 %v1044
      %v1237 = vunpack.c.l.b16 %v1045
      %v1238 = vunpack.c.l.b16 %v1046
      %v1239 = vunpack.c.l.b16 %v1047
      %v1240 = vunpack.c.l.b16 %v1048
      %v1241 = vunpack.c.l.b16 %v1049
      %v1242 = vunpack.c.l.b16 %v1050
      %v1243 = vunpack.c.l.b16 %v1051
      %v1244 = vunpack.c.l.b16 %v1052
      %v1245 = vunpack.c.l.b16 %v1053
      %v1246 = vunpack.c.l.b16 %v1054
      %v1247 = vunpack.c.l.b16 %v1055
      %v1248 = vunpack.c.l.b16 %v1056
      %v1249 = vunpack.c.l.b16 %v1057
      %v1250 = vunpack.c.l.b16 %v1058
      %v1251 = vunpack.c.l.b16 %v1059
      %v1252 = vunpack.c.l.b16 %v1060
      %v1253 = vunpack.c.l.b16 %v1061
      %v1254 = vunpack.c.l.b16 %v1062
      %v1255 = vunpack.c.l.b16 %v1063
      %v1256 = vunpack.c.l.b16 %v1064
      %v1257 = vunpack.c.l.b16 %v1065
      %v1258 = vunpack.c.l.b16 %v1066
      %v1259 = vunpack.c.l.b16 %v1067
      %v1260 = vunpack.c.l.b16 %v1068
      %v1261 = vunpack.c.l.b16 %v1069
      %v1262 = vunpack.c.l.b16 %v1070
      %v1263 = vunpack.c.l.b16 %v1071
      %v1264 = vunpack.c.l.b16 %v1072
      %v1265 = vunpack.c.l.b16 %v1073
      %v1266 = vunpack.c.l.b16 %v1074
      %v1267 = vunpack.c.l.b16 %v1075
      %v1268 = vunpack.c.l.b16 %v1076
      %v1269 = vunpack.c.l.b16 %v1077
      %v1270 = vunpack.c.l.b16 %v1078
      %v1271 = vunpack.c.l.b16 %v1079
      %v1272 = vunpack.c.l.b16 %v1080
      %v1273 = vunpack.c.l.b16 %v1081
      %v1274 = vunpack.c.l.b16 %v1082
      %v1275 = vunpack.c.l.b16 %v1083
      %v1276 = vunpack.c.l.b16 %v1084
      %v1277 = vunpack.c.l.b16 %v1085
      %v1278 = vunpack.c.l.b16 %v1086
      %v1279 = vunpack.c.l.b16 %v1087
      %v1280 = vunpack.c.l.b16 %v1088
      %v1281 = vunpack.c.l.b16 %v1089
      %v1282 = vunpack.c.l.b16 %v1090
      %v1283 = vunpack.c.l.b16 %v1091
      %v1284 = vunpack.c.l.b16 %v1092
      %v1285 = vunpack.c.l.b16 %v1093
      %v1286 = vunpack.c.l.b16 %v1094
      %v1287 = vunpack.c.l.b16 %v1095
      %v1288 = vunpack.c.l.b16 %v1096
      %v1289 = vunpack.c.l.b16 %v1097
      %v1290 = vunpack.c.l.b16 %v1098
      %v1291 = vunpack.c.l.b16 %v1099
      %v1292 = vunpack.c.l.b16 %v1100
      %v1293 = vunpack.c.l.b16 %v1101
      %v1294 = vunpack.c.l.b16 %v1102
      %v1295 = vunpack.c.l.b16 %v1103
      %v1296 = vunpack.c.l.b16 %v1104
      %v1297 = vunpack.c.l.b16 %v1105
      %v1298 = vunpack.c.l.b16 %v1106
      %v1299 = vunpack.c.l.b16 %v1107
      %v1300 = vunpack.c.l.b16 %v1108
      %v1301 = vunpack.c.l.b16 %v1109
      %v1302 = vunpack.c.l.b16 %v1110
      %v1303 = vunpack.c.l.b16 %v1111
      %v1304 = vunpack.c.l.b16 %v1112
      %v1305 = vunpack.c.l.b16 %v1113
      %v1306 = vunpack.c.l.b16 %v1114
      %v1307 = vunpack.c.l.b16 %v1115
      %v1308 = vunpack.c.l.b16 %v1116
      %v1309 = vunpack.c.l.b16 %v1117
      %v1310 = vunpack.c.l.b16 %v1118
      %v1311 = vunpack.c.l.b16 %v1119
      %v1312 = vunpack.c.l.b16 %v1120
      %v1313 = vunpack.c.l.b16 %v1121
      %v1314 = vunpack.c.l.b16 %v1122
      %v1315 = vunpack.c.l.b16 %v1123
      %v1316 = vunpack.c.l.b16 %v1124
      %v1317 = vunpack.c.l.b16 %v1125
      %v1318 = vunpack.c.l.b16 %v1126
      %v1319 = vunpack.c.l.b16 %v1127
      %v1320 = vunpack.c.l.b16 %v1128
      %v1321 = vunpack.c.l.b16 %v1129
      %v1322 = vunpack.c.l.b16 %v1130
      %v1323 = vpack.c.b16 %v1228, %v1227
      %v1324 = vpack.c.b16 %v1230, %v1229
      %v1325 = vpack.c.b16 %v1232, %v1231
      %v1326 = vpack.c.b16 %v1234, %v1233
      %v1327 = vpack.c.b16 %v1236, %v1235
      %v1328 = vpack.c.b16 %v1238, %v1237
      %v1329 = vpack.c.b16 %v1240, %v1239
      %v1330 = vpack.c.b16 %v1242, %v1241
      %v1331 = vpack.c.b16 %v1244, %v1243
      %v1332 = vpack.c.b16 %v1246, %v1245
      %v1333 = vpack.c.b16 %v1248, %v1247
      %v1334 = vpack.c.b16 %v1250, %v1249
      %v1335 = vpack.c.b16 %v1252, %v1251
      %v1336 = vpack.c.b16 %v1254, %v1253
      %v1337 = vpack.c.b16 %v1256, %v1255
      %v1338 = vpack.c.b16 %v1258, %v1257
      %v1339 = vpack.c.b16 %v1260, %v1259
      %v1340 = vpack.c.b16 %v1262, %v1261
      %v1341 = vpack.c.b16 %v1264, %v1263
      %v1342 = vpack.c.b16 %v1266, %v1265
      %v1343 = vpack.c.b16 %v1268, %v1267
      %v1344 = vpack.c.b16 %v1270, %v1269
      %v1345 = vpack.c.b16 %v1272, %v1271
      %v1346 = vpack.c.b16 %v1274, %v1273
      %v1347 = vpack.c.b16 %v1276, %v1275
      %v1348 = vpack.c.b16 %v1278, %v1277
      %v1349 = vpack.c.b16 %v1280, %v1279
      %v1350 = vpack.c.b16 %v1282, %v1281
      %v1351 = vpack.c.b16 %v1284, %v1283
      %v1352 = vpack.c.b16 %v1286, %v1285
      %v1353 = vpack.c.b16 %v1288, %v1287
      %v1354 = vpack.c.b16 %v1290, %v1289
      %v1355 = vpack.c.b16 %v1292, %v1291
      %v1356 = vpack.c.b16 %v1294, %v1293
      %v1357 = vpack.c.b16 %v1296, %v1295
      %v1358 = vpack.c.b16 %v1298, %v1297
      %v1359 = vpack.c.b16 %v1300, %v1299
      %v1360 = vpack.c.b16 %v1302, %v1301
      %v1361 = vpack.c.b16 %v1304, %v1303
      %v1362 = vpack.c.b16 %v1306, %v1305
      %v1363 = vpack.c.b16 %v1308, %v1307
      %v1364 = vpack.c.b16 %v1310, %v1309
      %v1365 = vpack.c.b16 %v1312, %v1311
      %v1366 = vpack.c.b16 %v1314, %v1313
      %v1367 = vpack.c.b16 %v1316, %v1315
      %v1368 = vpack.c.b16 %v1318, %v1317
      %v1369 = vpack.c.b16 %v1320, %v1319
      %v1370 = vpack.c.b16 %v1322, %v1321
      %1419 = vmatpush.bf16.msra.mxu0 %v1330
      %1420 = vmatpush.bf16.msra.mxu0 %v1329
      %1421 = vmatpush.bf16.msra.mxu0 %v1328
      %1422 = vmatpush.bf16.msra.mxu0 %v1327
      %1423 = vmatpush.bf16.msra.mxu0 %v1326
      %1424 = vmatpush.bf16.msra.mxu0 %v1325
      %1425 = vmatpush.bf16.msra.mxu0 %v1324
      %1426 = vmatpush.bf16.msra.mxu0 %v1323
      %1427 = vmatmul.bf16.gmra.mxu0 %v360
      %v1428 = vpop.f32.mrf.mxu0
      %v1429 = vadd.f32 %v546, %v1428
      %v1430 = vpop.f32.mrf.mxu0
      %v1431 = vadd.f32 %v546, %v1430
      %1432 = vmatmul.bf16.gmra.mxu0 %v363
      %v1433 = vpop.f32.mrf.mxu0
      %v1434 = vadd.f32 %v546, %v1433
      %v1435 = vpop.f32.mrf.mxu0
      %v1436 = vadd.f32 %v546, %v1435
      %1437 = vmatmul.bf16.gmra.mxu0 %v366
      %v1438 = vpop.f32.mrf.mxu0
      %v1439 = vadd.f32 %v546, %v1438
      %v1440 = vpop.f32.mrf.mxu0
      %v1441 = vadd.f32 %v546, %v1440
      %1442 = vmatmul.bf16.gmra.mxu0 %v369
      %v1443 = vpop.f32.mrf.mxu0
      %v1444 = vadd.f32 %v546, %v1443
      %v1445 = vpop.f32.mrf.mxu0
      %v1446 = vadd.f32 %v546, %v1445
      %1447 = vdwg.mxu0
      %1448 = vmatpush.bf16.msra.mxu0 %v1338
      %1449 = vmatpush.bf16.msra.mxu0 %v1337
      %1450 = vmatpush.bf16.msra.mxu0 %v1336
      %1451 = vmatpush.bf16.msra.mxu0 %v1335
      %1452 = vmatpush.bf16.msra.mxu0 %v1334
      %1453 = vmatpush.bf16.msra.mxu0 %v1333
      %1454 = vmatpush.bf16.msra.mxu0 %v1332
      %1455 = vmatpush.bf16.msra.mxu0 %v1331
      %1456 = vmatmul.bf16.gmra.mxu0 %v361
      %v1457 = vpop.f32.mrf.mxu0
      %v1458 = vadd.f32 %v1429, %v1457
      %v1459 = vpop.f32.mrf.mxu0
      %v1460 = vadd.f32 %v1431, %v1459
      %1461 = vmatmul.bf16.gmra.mxu0 %v364
      %v1462 = vpop.f32.mrf.mxu0
      %v1463 = vadd.f32 %v1434, %v1462
      %v1464 = vpop.f32.mrf.mxu0
      %v1465 = vadd.f32 %v1436, %v1464
      %1466 = vmatmul.bf16.gmra.mxu0 %v367
      %v1467 = vpop.f32.mrf.mxu0
      %v1468 = vadd.f32 %v1439, %v1467
      %v1469 = vpop.f32.mrf.mxu0
      %v1470 = vadd.f32 %v1441, %v1469
      %1471 = vmatmul.bf16.gmra.mxu0 %v370
      %v1472 = vpop.f32.mrf.mxu0
      %v1473 = vadd.f32 %v1444, %v1472
      %v1474 = vpop.f32.mrf.mxu0
      %v1475 = vadd.f32 %v1446, %v1474
      %1476 = vdwg.mxu0
      %1477 = vmatpush.bf16.msra.mxu0 %v1346
      %1478 = vmatpush.bf16.msra.mxu0 %v1345
      %1479 = vmatpush.bf16.msra.mxu0 %v1344
      %1480 = vmatpush.bf16.msra.mxu0 %v1343
      %1481 = vmatpush.bf16.msra.mxu0 %v1342
      %1482 = vmatpush.bf16.msra.mxu0 %v1341
      %1483 = vmatpush.bf16.msra.mxu0 %v1340
      %1484 = vmatpush.bf16.msra.mxu0 %v1339
      %1485 = vmatmul.bf16.gmra.mxu0 %v362
      %v1486 = vpop.f32.mrf.mxu0
      %v1487 = vadd.f32 %v1458, %v1486
      %v1488 = vpop.f32.mrf.mxu0
      %v1489 = vadd.f32 %v1460, %v1488
      %1490 = vmatmul.bf16.gmra.mxu0 %v365
      %v1491 = vpop.f32.mrf.mxu0
      %v1492 = vadd.f32 %v1463, %v1491
      %v1493 = vpop.f32.mrf.mxu0
      %v1494 = vadd.f32 %v1465, %v1493
      %1495 = vmatmul.bf16.gmra.mxu0 %v368
      %v1496 = vpop.f32.mrf.mxu0
      %v1497 = vadd.f32 %v1468, %v1496
      %v1498 = vpop.f32.mrf.mxu0
      %v1499 = vadd.f32 %v1470, %v1498
      %1500 = vmatmul.bf16.gmra.mxu0 %v371
      %v1501 = vpop.f32.mrf.mxu0
      %v1502 = vadd.f32 %v1473, %v1501
      %v1503 = vpop.f32.mrf.mxu0
      %v1504 = vadd.f32 %v1475, %v1503
      %1505 = vdwg.mxu0
      %1506 = vmatpush.bf16.msra.mxu0 %v1354
      %1507 = vmatpush.bf16.msra.mxu0 %v1353
      %1508 = vmatpush.bf16.msra.mxu0 %v1352
      %1509 = vmatpush.bf16.msra.mxu0 %v1351
      %1510 = vmatpush.bf16.msra.mxu0 %v1350
      %1511 = vmatpush.bf16.msra.mxu0 %v1349
      %1512 = vmatpush.bf16.msra.mxu0 %v1348
      %1513 = vmatpush.bf16.msra.mxu0 %v1347
      %1514 = vmatmul.bf16.gmra.mxu0 %v424
      %v1515 = vpop.f32.mrf.mxu0
      %v1516 = vadd.f32 %v1487, %v1515
      %v1517 = vpop.f32.mrf.mxu0
      %v1518 = vadd.f32 %v1489, %v1517
      %1519 = vmatmul.bf16.gmra.mxu0 %v427
      %v1520 = vpop.f32.mrf.mxu0
      %v1521 = vadd.f32 %v1492, %v1520
      %v1522 = vpop.f32.mrf.mxu0
      %v1523 = vadd.f32 %v1494, %v1522
      %1524 = vmatmul.bf16.gmra.mxu0 %v430
      %v1525 = vpop.f32.mrf.mxu0
      %v1526 = vadd.f32 %v1497, %v1525
      %v1527 = vpop.f32.mrf.mxu0
      %v1528 = vadd.f32 %v1499, %v1527
      %1529 = vmatmul.bf16.gmra.mxu0 %v433
      %v1530 = vpop.f32.mrf.mxu0
      %v1531 = vadd.f32 %v1502, %v1530
      %v1532 = vpop.f32.mrf.mxu0
      %v1533 = vadd.f32 %v1504, %v1532
      %1534 = vdwg.mxu0
      %1535 = vmatpush.bf16.msra.mxu0 %v1362
      %1536 = vmatpush.bf16.msra.mxu0 %v1361
      %1537 = vmatpush.bf16.msra.mxu0 %v1360
      %1538 = vmatpush.bf16.msra.mxu0 %v1359
      %1539 = vmatpush.bf16.msra.mxu0 %v1358
      %1540 = vmatpush.bf16.msra.mxu0 %v1357
      %1541 = vmatpush.bf16.msra.mxu0 %v1356
      %1542 = vmatpush.bf16.msra.mxu0 %v1355
      %1543 = vmatmul.bf16.gmra.mxu0 %v425
      %v1544 = vpop.f32.mrf.mxu0
      %v1545 = vadd.f32 %v1516, %v1544
      %v1546 = vpop.f32.mrf.mxu0
      %v1547 = vadd.f32 %v1518, %v1546
      %1548 = vmatmul.bf16.gmra.mxu0 %v428
      %v1549 = vpop.f32.mrf.mxu0
      %v1550 = vadd.f32 %v1521, %v1549
      %v1551 = vpop.f32.mrf.mxu0
      %v1552 = vadd.f32 %v1523, %v1551
      %1553 = vmatmul.bf16.gmra.mxu0 %v431
      %v1554 = vpop.f32.mrf.mxu0
      %v1555 = vadd.f32 %v1526, %v1554
      %v1556 = vpop.f32.mrf.mxu0
      %v1557 = vadd.f32 %v1528, %v1556
      %1558 = vmatmul.bf16.gmra.mxu0 %v434
      %v1559 = vpop.f32.mrf.mxu0
      %v1560 = vadd.f32 %v1531, %v1559
      %v1561 = vpop.f32.mrf.mxu0
      %v1562 = vadd.f32 %v1533, %v1561
      %1563 = vdwg.mxu0
      %1564 = vmatpush.bf16.msra.mxu0 %v1370
      %1565 = vmatpush.bf16.msra.mxu0 %v1369
      %1566 = vmatpush.bf16.msra.mxu0 %v1368
      %1567 = vmatpush.bf16.msra.mxu0 %v1367
      %1568 = vmatpush.bf16.msra.mxu0 %v1366
      %1569 = vmatpush.bf16.msra.mxu0 %v1365
      %1570 = vmatpush.bf16.msra.mxu0 %v1364
      %1571 = vmatpush.bf16.msra.mxu0 %v1363
      %1572 = vmatmul.bf16.gmra.mxu0 %v426
      %v1573 = vpop.f32.mrf.mxu0
      %v1574 = vadd.f32 %v1545, %v1573
      %v1575 = vpop.f32.mrf.mxu0
      %v1576 = vadd.f32 %v1547, %v1575
      %1577 = vmatmul.bf16.gmra.mxu0 %v429
      %v1578 = vpop.f32.mrf.mxu0
      %v1579 = vadd.f32 %v1550, %v1578
      %v1580 = vpop.f32.mrf.mxu0
      %v1581 = vadd.f32 %v1552, %v1580
      %1582 = vmatmul.bf16.gmra.mxu0 %v432
      %v1583 = vpop.f32.mrf.mxu0
      %v1584 = vadd.f32 %v1555, %v1583
      %v1585 = vpop.f32.mrf.mxu0
      %v1586 = vadd.f32 %v1557, %v1585
      %1587 = vmatmul.bf16.gmra.mxu0 %v435
      %v1588 = vpop.f32.mrf.mxu0
      %v1589 = vadd.f32 %v1560, %v1588
      %v1590 = vpop.f32.mrf.mxu0
      %v1591 = vadd.f32 %v1562, %v1590
      %1592 = vdwg.mxu0
      %v1593 = vmax.f32 %v1574, 0.0
      %v1594 = vmax.f32 %v1576, 0.0
      %v1595 = vmax.f32 %v1579, 0.0
      %v1596 = vmax.f32 %v1581, 0.0
      %v1597 = vmax.f32 %v1584, 0.0
      %v1598 = vmax.f32 %v1586, 0.0
      %v1599 = vmax.f32 %v1589, 0.0
      %v1600 = vmax.f32 %v1591, 0.0
      %v1601 = vpack.c.bf16 %v1593, %v1593
      %v1602 = vpack.c.bf16 %v1594, %v1594
      %v1603 = vpack.c.bf16 %v1595, %v1595
      %v1604 = vpack.c.bf16 %v1596, %v1596
      %v1605 = vpack.c.bf16 %v1597, %v1597
      %v1606 = vpack.c.bf16 %v1598, %v1598
      %v1607 = vpack.c.bf16 %v1599, %v1599
      %v1608 = vpack.c.bf16 %v1600, %v1600
      %s1609 = scalar_lea.vmem %s194, 8
      %1610 = vst [vmem:[%s1609] sm:$0xf] %v1601
      %1611 = vst [vmem:[%s1609 + $0x4] sm:$0xf] %v1602
      %1612 = vst [vmem:[%s1609 + $0x10] sm:$0xf] %v1603
      %1613 = vst [vmem:[%s1609 + $0x14] sm:$0xf] %v1604
      %1614 = vst [vmem:[%s1609 + $0x20] sm:$0xf] %v1605
      %1615 = vst [vmem:[%s1609 + $0x24] sm:$0xf] %v1606
      %1616 = vst [vmem:[%s1609 + $0x30] sm:$0xf] %v1607
      %1617 = vst [vmem:[%s1609 + $0x34] sm:$0xf] %v1608
      %s1618 = smul.u32 4, %s19
      %p1619 = scmp.lt.s32.totalorder %s18, 1
      %s1620 = scalar_select %p1619, %s18, 1
      %p1621 = scmp.lt.s32.totalorder %s1618, 15
      %s1622 = scalar_select %p1621, %s1618, 15
      %s1623 = smul.addr %s1622, 4
      %s1624 = smul.addr %s1620, 64
      %s1625 = sadd.s32 %s1623, %s1624
      %s1626 = smul.addr %s1625, 4
      %s1627 = scalar_lea.vmem %s3, %s1626
      // Predicated region
      $region33: #{up_conv_forward.1} parent=31 // pred_check
        %p1628 = pneg %p114
      $region34: #{up_conv_forward.1} parent=31 // pred_check_branch
        %1630 = sbr.rel (%p1628) target = $region36
      $region35: #{up_conv_forward.1} parent=31 // pred_region
        %s1631 = smul.u32 4, %s19
      $region36: #{up_conv_forward.1} parent=31 // pred_fallthru
        _
    $region32: #{up_conv_forward.1} parent=5 // pred_fallthru
      _
    %p1632 = scmp.le.s32.totalorder 2, %s9
    // Predicated region
    $region37: #{up_conv_forward.1} parent=5 // pred_check
      %p1633 = pneg %p1632
    $region38: #{up_conv_forward.1} parent=5 // pred_check_branch
      %1635 = sbr.rel (%p1633) target = $region40
    $region39: #{up_conv_forward.1} parent=5 // pred_region
      %s1636 = ssub.s32 %s9, 2
      // Predicated region
      $region41: #{up_conv_forward.1} parent=39 // pred_check
        %p1637 = pneg %p120
      $region42: #{up_conv_forward.1} parent=39 // pred_check_branch
        %1639 = sbr.rel (%p1637) target = $region44
      $region43: #{up_conv_forward.1} parent=39 // pred_region
        %s1640 = smul.u32 4, %s21
        %p1641 = scmp.lt.s32.totalorder %s20, 1
        %s1642 = scalar_select %p1641, %s20, 1
        %p1643 = scmp.lt.s32.totalorder %s1640, 15
        %s1644 = scalar_select %p1643, %s1640, 15
        %s1645 = smul.addr %s1644, 4
        %s1646 = smul.addr %s1642, 64
        %s1647 = sadd.s32 %s1645, %s1646
        %s1648 = smul.addr %s1647, 4
        %s1649 = scalar_lea.vmem %s3, %s1648
      $region44: #{up_conv_forward.1} parent=39 // pred_fallthru
        _
    $region40: #{up_conv_forward.1} parent=5 // pred_fallthru
      _
  $region6: #{up_conv_forward.1} parent=0 // loop_footer
    %s13 = sadd.s32 1, %s9
  $region7: #{up_conv_forward.1} parent=0 // loop_footer_branch
    %8 = sbr.rel target = $region3
  $region8: #{up_conv_forward.1} parent=0 // loop_exit
    _

</llo_original>
